<compile_context>
chip_gen: v5e
topology: v5e:2x2
jax: 0.10.0
libtpu: 0.0.40
codegen_flags: <defaults>
</compile_context>

<pallas_src>
import jax
import jax.numpy as jnp
from jax.experimental import pallas as pl

IN_DIM = 1280      # fixed by nn.LSTM(1280, ...)
HIDDEN = 32        # output_dim
NUM_CLASSES = 8    # num_classes
NUM_LAYERS = 3
BATCH = 2
SEQ = 8


def ae_lstm_kernel(x_ref, wih0_ref, wrec_ref, b_ref, wcls_ref, bcls_ref, out_ref):
    """Single invocation. x_ref: (B, T, 1280); out_ref: (B, T, C); all operands VMEM-resident."""
    # ---- layer-0 input projection for ALL timesteps: one big MXU matmul ----
    x_all = x_ref[...].reshape(BATCH * SEQ, IN_DIM)            # row index = b*SEQ + t
    xw0 = (jnp.dot(x_all, wih0_ref[...], preferred_element_type=jnp.float32)
           + b_ref[0:1, :])                                    # (B*T, 4H), layer-0 bias folded in

    # ---- static slices of the packed weight/bias slabs (hoisted out of the time loop) ----
    whh0 = wrec_ref[0:HIDDEN, :]                               # (H, 4H)
    w1 = wrec_ref[HIDDEN:3 * HIDDEN, :]                        # (2H, 4H) = [w_ih1; w_hh1]
    w2 = wrec_ref[3 * HIDDEN:5 * HIDDEN, :]                    # (2H, 4H) = [w_ih2; w_hh2]
    b1 = jnp.broadcast_to(b_ref[1:2, :], (BATCH, 4 * HIDDEN))  # hoisted broadcasts
    b2 = jnp.broadcast_to(b_ref[2:3, :], (BATCH, 4 * HIDDEN))

    def cell(gates, c_prev):
        # PyTorch gate order i, f, g, o; activations on the full 4H-wide vector, then slice.
        sig = jax.nn.sigmoid(gates)
        th = jnp.tanh(gates)
        i = sig[:, 0 * HIDDEN:1 * HIDDEN]
        f = sig[:, 1 * HIDDEN:2 * HIDDEN]
        g = th[:, 2 * HIDDEN:3 * HIDDEN]
        o = sig[:, 3 * HIDDEN:4 * HIDDEN]
        c_new = f * c_prev + i * g
        h_new = o * jnp.tanh(c_new)
        return h_new, c_new

    zeros = jnp.zeros((BATCH, HIDDEN), jnp.float32)
    h0 = c0 = h1 = c1 = h2 = c2 = zeros
    h2_steps = []
    for t in range(SEQ):                                       # fully unrolled recurrence
        # this timestep's precomputed layer-0 gate rows (row b*SEQ + t for each batch b)
        xg = jnp.concatenate(
            [xw0[b * SEQ + t:b * SEQ + t + 1, :] for b in range(BATCH)], axis=0)   # (B, 4H)
        h0, c0 = cell(xg + jnp.dot(h0, whh0, preferred_element_type=jnp.float32), c0)
        h1, c1 = cell(jnp.dot(jnp.concatenate([h0, h1], axis=1), w1,
                              preferred_element_type=jnp.float32) + b1, c1)
        h2, c2 = cell(jnp.dot(jnp.concatenate([h1, h2], axis=1), w2,
                              preferred_element_type=jnp.float32) + b2, c2)
        h2_steps.append(h2)

    # ---- classifier once, on all B*T hidden states, assembled batch-first ----
    h_bf = jnp.concatenate(
        [jnp.concatenate([h2_steps[t][b:b + 1, :] for t in range(SEQ)], axis=0)
         for b in range(BATCH)], axis=0)                       # (B*T, H), row = b*SEQ + t
    logits = (jnp.dot(h_bf, wcls_ref[...], preferred_element_type=jnp.float32)
              + bcls_ref[...])                                 # (B*T, C)
    out_ref[...] = logits.reshape(BATCH, SEQ, NUM_CLASSES).astype(out_ref.dtype)


def auto_encoder_lstm_forward(x, packed):
    """x: (B, 1, T, 1280) float32 -> (B, T, num_classes) float32 (batch_first)."""
    assert x.shape == (BATCH, 1, SEQ, IN_DIM)
    feat = x[:, 0]                     # feature_extractor (Identity) + squeeze(1): (B, T, 1280)

    flops = (2 * BATCH * SEQ * IN_DIM * 4 * HIDDEN                       # layer-0 input proj
             + 2 * BATCH * SEQ * (5 * HIDDEN) * 4 * HIDDEN               # recurrent matmuls
             + 2 * BATCH * SEQ * HIDDEN * NUM_CLASSES)                   # classifier
    transcendentals = BATCH * SEQ * NUM_LAYERS * (2 * 4 * HIDDEN + HIDDEN)
    bytes_accessed = 4 * (feat.size + packed["wih0"].size + packed["w_rec"].size
                          + packed["b_all"].size + packed["wcls"].size
                          + packed["bcls"].size + BATCH * SEQ * NUM_CLASSES)

    return pl.pallas_call(
        ae_lstm_kernel,
        out_shape=jax.ShapeDtypeStruct((BATCH, SEQ, NUM_CLASSES), jnp.float32),
        cost_estimate=pl.CostEstimate(flops=flops, transcendentals=transcendentals,
                                      bytes_accessed=bytes_accessed),
    )(feat, packed["wih0"], packed["w_rec"], packed["b_all"],
      packed["wcls"], packed["bcls"])


def init_params(key):
    """Deterministic params in PyTorch nn.LSTM / nn.Linear layout."""
    bound = 1.0 / jnp.sqrt(jnp.float32(HIDDEN))
    raw = {}
    in_dims = [IN_DIM, HIDDEN, HIDDEN]
    for layer in range(NUM_LAYERS):
        key, k1, k2, k3, k4 = jax.random.split(key, 5)
        raw[f"w_ih{layer}"] = jax.random.uniform(k1, (4 * HIDDEN, in_dims[layer]),
                                                 jnp.float32, -bound, bound)
        raw[f"w_hh{layer}"] = jax.random.uniform(k2, (4 * HIDDEN, HIDDEN),
                                                 jnp.float32, -bound, bound)
        raw[f"b_ih{layer}"] = jax.random.uniform(k3, (4 * HIDDEN,), jnp.float32, -bound, bound)
        raw[f"b_hh{layer}"] = jax.random.uniform(k4, (4 * HIDDEN,), jnp.float32, -bound, bound)
    key, k1, k2 = jax.random.split(key, 3)
    raw["w_cls"] = jax.random.uniform(k1, (NUM_CLASSES, HIDDEN), jnp.float32, -bound, bound)
    raw["b_cls"] = jax.random.uniform(k2, (NUM_CLASSES,), jnp.float32, -bound, bound)
    return raw


def pack_params(raw):
    """Pack PyTorch-layout weights into the kernel's fused / concatenated slabs (done once)."""
    wih0 = raw["w_ih0"].T                                               # (1280, 4H)
    w_rec = jnp.concatenate(
        [raw["w_hh0"].T,                                                # (H, 4H)
         jnp.concatenate([raw["w_ih1"].T, raw["w_hh1"].T], axis=0),     # (2H, 4H)
         jnp.concatenate([raw["w_ih2"].T, raw["w_hh2"].T], axis=0)],    # (2H, 4H)
        axis=0)                                                         # (5H, 4H)
    b_all = jnp.stack([raw[f"b_ih{l}"] + raw[f"b_hh{l}"] for l in range(NUM_LAYERS)],
                      axis=0)                                           # (3, 4H)
    return {"wih0": wih0, "w_rec": w_rec, "b_all": b_all,
            "wcls": raw["w_cls"].T, "bcls": raw["b_cls"][None, :]}


def reference_forward(x, raw):
    """Pure-JAX reference with PyTorch LSTM semantics (f32, un-fused weights)."""
    seq = x[:, 0]                                                       # (B, T, 1280)
    for layer in range(NUM_LAYERS):
        w_ih = raw[f"w_ih{layer}"]
        w_hh = raw[f"w_hh{layer}"]
        b = raw[f"b_ih{layer}"] + raw[f"b_hh{layer}"]

        def step(carry, x_t, w_ih=w_ih, w_hh=w_hh, b=b):
            h, c = carry
            gates = x_t @ w_ih.T + h @ w_hh.T + b
            i = jax.nn.sigmoid(gates[:, :HIDDEN])
            f = jax.nn.sigmoid(gates[:, HIDDEN:2 * HIDDEN])
            g = jnp.tanh(gates[:, 2 * HIDDEN:3 * HIDDEN])
            o = jax.nn.sigmoid(gates[:, 3 * HIDDEN:])
            c = f * c + i * g
            h = o * jnp.tanh(c)
            return (h, c), h

        h0 = jnp.zeros((BATCH, HIDDEN), jnp.float32)
        (_, _), ys = jax.lax.scan(step, (h0, h0), jnp.swapaxes(seq, 0, 1))
        seq = jnp.swapaxes(ys, 0, 1)
    return seq @ raw["w_cls"].T + raw["b_cls"]


if __name__ == "__main__":
    key = jax.random.PRNGKey(0)
    key, xk = jax.random.split(key)
    x = jax.random.normal(xk, (BATCH, 1, SEQ, IN_DIM), jnp.float32)

    raw = init_params(key)
    packed = pack_params(raw)

    out = jax.block_until_ready(auto_encoder_lstm_forward(x, packed))
    ref = jax.block_until_ready(reference_forward(x, raw))

    assert out.shape == (BATCH, SEQ, NUM_CLASSES)
    assert jnp.allclose(out, ref, atol=1e-3, rtol=1e-3)
    print("KERNEL_OK")
</pallas_src>

<mosaic_0001>
module attributes {stable_mosaic.version = 11 : i64} {
  func.func @ae_lstm_kernel(%arg0: memref<2x8x1280xf32, #tpu.memory_space<vmem>>, %arg1: memref<1280x128xf32, #tpu.memory_space<vmem>>, %arg2: memref<160x128xf32, #tpu.memory_space<vmem>>, %arg3: memref<3x128xf32, #tpu.memory_space<vmem>>, %arg4: memref<32x8xf32, #tpu.memory_space<vmem>>, %arg5: memref<1x8xf32, #tpu.memory_space<vmem>>, %arg6: memref<2x8x8xf32, #tpu.memory_space<vmem>>) attributes {dimension_semantics = [], scalar_prefetch = 0 : i64, scratch_operands = 0 : i64, tpu.core_type = #tpu.core_type<tc>} {
    %c0 = arith.constant 0 : index
    %c0_0 = arith.constant 0 : index
    %c0_1 = arith.constant 0 : index
    %0 = vector.load %arg0[%c0, %c0_0, %c0_1] : memref<2x8x1280xf32, #tpu.memory_space<vmem>>, vector<2x8x1280xf32>
    %1 = vector.shape_cast %0 : vector<2x8x1280xf32> to vector<16x1280xf32>
    %c0_2 = arith.constant 0 : index
    %c0_3 = arith.constant 0 : index
    %2 = vector.load %arg1[%c0_2, %c0_3] : memref<1280x128xf32, #tpu.memory_space<vmem>>, vector<1280x128xf32>
    %cst = arith.constant dense<0.000000e+00> : vector<16x128xf32>
    %3 = tpu.matmul %1, %2, %cst {dimension_numbers = #tpu.dot_dimension_numbers<[1], [0], [0], [1], [0, 0, 1, 1], [], []>} : vector<16x1280xf32>, vector<1280x128xf32>, vector<16x128xf32> -> vector<16x128xf32>
    %c0_4 = arith.constant 0 : index
    %c0_5 = arith.constant 0 : index
    %4 = vector.load %arg3[%c0_4, %c0_5] : memref<3x128xf32, #tpu.memory_space<vmem>>, vector<1x128xf32>
    %5 = vector.broadcast %4 : vector<1x128xf32> to vector<16x128xf32>
    %6 = arith.addf %3, %5 : vector<16x128xf32>
    %c0_6 = arith.constant 0 : index
    %c0_7 = arith.constant 0 : index
    %7 = vector.load %arg2[%c0_6, %c0_7] : memref<160x128xf32, #tpu.memory_space<vmem>>, vector<32x128xf32>
    %c32 = arith.constant 32 : index
    %c0_8 = arith.constant 0 : index
    %8 = vector.load %arg2[%c32, %c0_8] : memref<160x128xf32, #tpu.memory_space<vmem>>, vector<64x128xf32>
    %c96 = arith.constant 96 : index
    %c0_9 = arith.constant 0 : index
    %9 = vector.load %arg2[%c96, %c0_9] : memref<160x128xf32, #tpu.memory_space<vmem>>, vector<64x128xf32>
    %c1 = arith.constant 1 : index
    %c0_10 = arith.constant 0 : index
    %10 = vector.load %arg3[%c1, %c0_10] : memref<3x128xf32, #tpu.memory_space<vmem>>, vector<1x128xf32>
    %11 = vector.shape_cast %10 : vector<1x128xf32> to vector<1x128xf32>
    %12 = vector.broadcast %11 : vector<1x128xf32> to vector<2x128xf32>
    %c2 = arith.constant 2 : index
    %c0_11 = arith.constant 0 : index
    %13 = vector.load %arg3[%c2, %c0_11] : memref<3x128xf32, #tpu.memory_space<vmem>>, vector<1x128xf32>
    %14 = vector.shape_cast %13 : vector<1x128xf32> to vector<1x128xf32>
    %15 = vector.broadcast %14 : vector<1x128xf32> to vector<2x128xf32>
    %cst_12 = arith.constant 0.000000e+00 : f32
    %16 = vector.broadcast %cst_12 : f32 to vector<2x32xf32>
    %17 = vector.extract_strided_slice %6 {offsets = [0, 0], sizes = [1, 128], strides = [1, 1]} : vector<16x128xf32> to vector<1x128xf32>
    %18 = vector.extract_strided_slice %6 {offsets = [8, 0], sizes = [1, 128], strides = [1, 1]} : vector<16x128xf32> to vector<1x128xf32>
    %19 = tpu.concatenate %17, %18 in 0 : vector<1x128xf32>, vector<1x128xf32> -> vector<2x128xf32>
    %cst_13 = arith.constant dense<0.000000e+00> : vector<2x128xf32>
    %20 = tpu.matmul %16, %7, %cst_13 {dimension_numbers = #tpu.dot_dimension_numbers<[1], [0], [0], [1], [0, 0, 1, 1], [], []>} : vector<2x32xf32>, vector<32x128xf32>, vector<2x128xf32> -> vector<2x128xf32>
    %21 = arith.addf %19, %20 : vector<2x128xf32>
    %22 = arith.negf %21 : vector<2x128xf32>
    %23 = math.exp %22 : vector<2x128xf32>
    %cst_14 = arith.constant 1.000000e+00 : f32
    %24 = vector.broadcast %cst_14 : f32 to vector<2x128xf32>
    %25 = arith.addf %24, %23 : vector<2x128xf32>
    %26 = arith.divf %24, %25 : vector<2x128xf32>
    %27 = math.tanh %21 : vector<2x128xf32>
    %28 = vector.extract_strided_slice %26 {offsets = [0, 0], sizes = [2, 32], strides = [1, 1]} : vector<2x128xf32> to vector<2x32xf32>
    %29 = vector.extract_strided_slice %26 {offsets = [0, 32], sizes = [2, 32], strides = [1, 1]} : vector<2x128xf32> to vector<2x32xf32>
    %30 = vector.extract_strided_slice %27 {offsets = [0, 64], sizes = [2, 32], strides = [1, 1]} : vector<2x128xf32> to vector<2x32xf32>
    %31 = vector.extract_strided_slice %26 {offsets = [0, 96], sizes = [2, 32], strides = [1, 1]} : vector<2x128xf32> to vector<2x32xf32>
    %32 = arith.mulf %29, %16 : vector<2x32xf32>
    %33 = arith.mulf %28, %30 : vector<2x32xf32>
    %34 = arith.addf %32, %33 : vector<2x32xf32>
    %35 = math.tanh %34 : vector<2x32xf32>
    %36 = arith.mulf %31, %35 : vector<2x32xf32>
    %37 = tpu.concatenate %36, %16 in 1 : vector<2x32xf32>, vector<2x32xf32> -> vector<2x64xf32>
    %cst_15 = arith.constant dense<0.000000e+00> : vector<2x128xf32>
    %38 = tpu.matmul %37, %8, %cst_15 {dimension_numbers = #tpu.dot_dimension_numbers<[1], [0], [0], [1], [0, 0, 1, 1], [], []>} : vector<2x64xf32>, vector<64x128xf32>, vector<2x128xf32> -> vector<2x128xf32>
    %39 = arith.addf %38, %12 : vector<2x128xf32>
    %40 = arith.negf %39 : vector<2x128xf32>
    %41 = math.exp %40 : vector<2x128xf32>
    %cst_16 = arith.constant 1.000000e+00 : f32
    %42 = vector.broadcast %cst_16 : f32 to vector<2x128xf32>
    %43 = arith.addf %42, %41 : vector<2x128xf32>
    %44 = arith.divf %42, %43 : vector<2x128xf32>
    %45 = math.tanh %39 : vector<2x128xf32>
    %46 = vector.extract_strided_slice %44 {offsets = [0, 0], sizes = [2, 32], strides = [1, 1]} : vector<2x128xf32> to vector<2x32xf32>
    %47 = vector.extract_strided_slice %44 {offsets = [0, 32], sizes = [2, 32], strides = [1, 1]} : vector<2x128xf32> to vector<2x32xf32>
    %48 = vector.extract_strided_slice %45 {offsets = [0, 64], sizes = [2, 32], strides = [1, 1]} : vector<2x128xf32> to vector<2x32xf32>
    %49 = vector.extract_strided_slice %44 {offsets = [0, 96], sizes = [2, 32], strides = [1, 1]} : vector<2x128xf32> to vector<2x32xf32>
    %50 = arith.mulf %47, %16 : vector<2x32xf32>
    %51 = arith.mulf %46, %48 : vector<2x32xf32>
    %52 = arith.addf %50, %51 : vector<2x32xf32>
    %53 = math.tanh %52 : vector<2x32xf32>
    %54 = arith.mulf %49, %53 : vector<2x32xf32>
    %55 = tpu.concatenate %54, %16 in 1 : vector<2x32xf32>, vector<2x32xf32> -> vector<2x64xf32>
    %cst_17 = arith.constant dense<0.000000e+00> : vector<2x128xf32>
    %56 = tpu.matmul %55, %9, %cst_17 {dimension_numbers = #tpu.dot_dimension_numbers<[1], [0], [0], [1], [0, 0, 1, 1], [], []>} : vector<2x64xf32>, vector<64x128xf32>, vector<2x128xf32> -> vector<2x128xf32>
    %57 = arith.addf %56, %15 : vector<2x128xf32>
    %58 = arith.negf %57 : vector<2x128xf32>
    %59 = math.exp %58 : vector<2x128xf32>
    %cst_18 = arith.constant 1.000000e+00 : f32
    %60 = vector.broadcast %cst_18 : f32 to vector<2x128xf32>
    %61 = arith.addf %60, %59 : vector<2x128xf32>
    %62 = arith.divf %60, %61 : vector<2x128xf32>
    %63 = math.tanh %57 : vector<2x128xf32>
    %64 = vector.extract_strided_slice %62 {offsets = [0, 0], sizes = [2, 32], strides = [1, 1]} : vector<2x128xf32> to vector<2x32xf32>
    %65 = vector.extract_strided_slice %62 {offsets = [0, 32], sizes = [2, 32], strides = [1, 1]} : vector<2x128xf32> to vector<2x32xf32>
    %66 = vector.extract_strided_slice %63 {offsets = [0, 64], sizes = [2, 32], strides = [1, 1]} : vector<2x128xf32> to vector<2x32xf32>
    %67 = vector.extract_strided_slice %62 {offsets = [0, 96], sizes = [2, 32], strides = [1, 1]} : vector<2x128xf32> to vector<2x32xf32>
    %68 = arith.mulf %65, %16 : vector<2x32xf32>
    %69 = arith.mulf %64, %66 : vector<2x32xf32>
    %70 = arith.addf %68, %69 : vector<2x32xf32>
    %71 = math.tanh %70 : vector<2x32xf32>
    %72 = arith.mulf %67, %71 : vector<2x32xf32>
    %73 = vector.extract_strided_slice %6 {offsets = [1, 0], sizes = [1, 128], strides = [1, 1]} : vector<16x128xf32> to vector<1x128xf32>
    %74 = vector.extract_strided_slice %6 {offsets = [9, 0], sizes = [1, 128], strides = [1, 1]} : vector<16x128xf32> to vector<1x128xf32>
    %75 = tpu.concatenate %73, %74 in 0 : vector<1x128xf32>, vector<1x128xf32> -> vector<2x128xf32>
    %cst_19 = arith.constant dense<0.000000e+00> : vector<2x128xf32>
    %76 = tpu.matmul %36, %7, %cst_19 {dimension_numbers = #tpu.dot_dimension_numbers<[1], [0], [0], [1], [0, 0, 1, 1], [], []>} : vector<2x32xf32>, vector<32x128xf32>, vector<2x128xf32> -> vector<2x128xf32>
    %77 = arith.addf %75, %76 : vector<2x128xf32>
    %78 = arith.negf %77 : vector<2x128xf32>
    %79 = math.exp %78 : vector<2x128xf32>
    %cst_20 = arith.constant 1.000000e+00 : f32
    %80 = vector.broadcast %cst_20 : f32 to vector<2x128xf32>
    %81 = arith.addf %80, %79 : vector<2x128xf32>
    %82 = arith.divf %80, %81 : vector<2x128xf32>
    %83 = math.tanh %77 : vector<2x128xf32>
    %84 = vector.extract_strided_slice %82 {offsets = [0, 0], sizes = [2, 32], strides = [1, 1]} : vector<2x128xf32> to vector<2x32xf32>
    %85 = vector.extract_strided_slice %82 {offsets = [0, 32], sizes = [2, 32], strides = [1, 1]} : vector<2x128xf32> to vector<2x32xf32>
    %86 = vector.extract_strided_slice %83 {offsets = [0, 64], sizes = [2, 32], strides = [1, 1]} : vector<2x128xf32> to vector<2x32xf32>
    %87 = vector.extract_strided_slice %82 {offsets = [0, 96], sizes = [2, 32], strides = [1, 1]} : vector<2x128xf32> to vector<2x32xf32>
    %88 = arith.mulf %85, %34 : vector<2x32xf32>
    %89 = arith.mulf %84, %86 : vector<2x32xf32>
    %90 = arith.addf %88, %89 : vector<2x32xf32>
    %91 = math.tanh %90 : vector<2x32xf32>
    %92 = arith.mulf %87, %91 : vector<2x32xf32>
    %93 = tpu.concatenate %92, %54 in 1 : vector<2x32xf32>, vector<2x32xf32> -> vector<2x64xf32>
    %cst_21 = arith.constant dense<0.000000e+00> : vector<2x128xf32>
    %94 = tpu.matmul %93, %8, %cst_21 {dimension_numbers = #tpu.dot_dimension_numbers<[1], [0], [0], [1], [0, 0, 1, 1], [], []>} : vector<2x64xf32>, vector<64x128xf32>, vector<2x128xf32> -> vector<2x128xf32>
    %95 = arith.addf %94, %12 : vector<2x128xf32>
    %96 = arith.negf %95 : vector<2x128xf32>
    %97 = math.exp %96 : vector<2x128xf32>
    %cst_22 = arith.constant 1.000000e+00 : f32
    %98 = vector.broadcast %cst_22 : f32 to vector<2x128xf32>
    %99 = arith.addf %98, %97 : vector<2x128xf32>
    %100 = arith.divf %98, %99 : vector<2x128xf32>
    %101 = math.tanh %95 : vector<2x128xf32>
    %102 = vector.extract_strided_slice %100 {offsets = [0, 0], sizes = [2, 32], strides = [1, 1]} : vector<2x128xf32> to vector<2x32xf32>
    %103 = vector.extract_strided_slice %100 {offsets = [0, 32], sizes = [2, 32], strides = [1, 1]} : vector<2x128xf32> to vector<2x32xf32>
    %104 = vector.extract_strided_slice %101 {offsets = [0, 64], sizes = [2, 32], strides = [1, 1]} : vector<2x128xf32> to vector<2x32xf32>
    %105 = vector.extract_strided_slice %100 {offsets = [0, 96], sizes = [2, 32], strides = [1, 1]} : vector<2x128xf32> to vector<2x32xf32>
    %106 = arith.mulf %103, %52 : vector<2x32xf32>
    %107 = arith.mulf %102, %104 : vector<2x32xf32>
    %108 = arith.addf %106, %107 : vector<2x32xf32>
    %109 = math.tanh %108 : vector<2x32xf32>
    %110 = arith.mulf %105, %109 : vector<2x32xf32>
    %111 = tpu.concatenate %110, %72 in 1 : vector<2x32xf32>, vector<2x32xf32> -> vector<2x64xf32>
    %cst_23 = arith.constant dense<0.000000e+00> : vector<2x128xf32>
    %112 = tpu.matmul %111, %9, %cst_23 {dimension_numbers = #tpu.dot_dimension_numbers<[1], [0], [0], [1], [0, 0, 1, 1], [], []>} : vector<2x64xf32>, vector<64x128xf32>, vector<2x128xf32> -> vector<2x128xf32>
    %113 = arith.addf %112, %15 : vector<2x128xf32>
    %114 = arith.negf %113 : vector<2x128xf32>
    %115 = math.exp %114 : vector<2x128xf32>
    %cst_24 = arith.constant 1.000000e+00 : f32
    %116 = vector.broadcast %cst_24 : f32 to vector<2x128xf32>
    %117 = arith.addf %116, %115 : vector<2x128xf32>
    %118 = arith.divf %116, %117 : vector<2x128xf32>
    %119 = math.tanh %113 : vector<2x128xf32>
    %120 = vector.extract_strided_slice %118 {offsets = [0, 0], sizes = [2, 32], strides = [1, 1]} : vector<2x128xf32> to vector<2x32xf32>
    %121 = vector.extract_strided_slice %118 {offsets = [0, 32], sizes = [2, 32], strides = [1, 1]} : vector<2x128xf32> to vector<2x32xf32>
    %122 = vector.extract_strided_slice %119 {offsets = [0, 64], sizes = [2, 32], strides = [1, 1]} : vector<2x128xf32> to vector<2x32xf32>
    %123 = vector.extract_strided_slice %118 {offsets = [0, 96], sizes = [2, 32], strides = [1, 1]} : vector<2x128xf32> to vector<2x32xf32>
    %124 = arith.mulf %121, %70 : vector<2x32xf32>
    %125 = arith.mulf %120, %122 : vector<2x32xf32>
    %126 = arith.addf %124, %125 : vector<2x32xf32>
    %127 = math.tanh %126 : vector<2x32xf32>
    %128 = arith.mulf %123, %127 : vector<2x32xf32>
    %129 = vector.extract_strided_slice %6 {offsets = [2, 0], sizes = [1, 128], strides = [1, 1]} : vector<16x128xf32> to vector<1x128xf32>
    %130 = vector.extract_strided_slice %6 {offsets = [10, 0], sizes = [1, 128], strides = [1, 1]} : vector<16x128xf32> to vector<1x128xf32>
    %131 = tpu.concatenate %129, %130 in 0 : vector<1x128xf32>, vector<1x128xf32> -> vector<2x128xf32>
    %cst_25 = arith.constant dense<0.000000e+00> : vector<2x128xf32>
    %132 = tpu.matmul %92, %7, %cst_25 {dimension_numbers = #tpu.dot_dimension_numbers<[1], [0], [0], [1], [0, 0, 1, 1], [], []>} : vector<2x32xf32>, vector<32x128xf32>, vector<2x128xf32> -> vector<2x128xf32>
    %133 = arith.addf %131, %132 : vector<2x128xf32>
    %134 = arith.negf %133 : vector<2x128xf32>
    %135 = math.exp %134 : vector<2x128xf32>
    %cst_26 = arith.constant 1.000000e+00 : f32
    %136 = vector.broadcast %cst_26 : f32 to vector<2x128xf32>
    %137 = arith.addf %136, %135 : vector<2x128xf32>
    %138 = arith.divf %136, %137 : vector<2x128xf32>
    %139 = math.tanh %133 : vector<2x128xf32>
    %140 = vector.extract_strided_slice %138 {offsets = [0, 0], sizes = [2, 32], strides = [1, 1]} : vector<2x128xf32> to vector<2x32xf32>
    %141 = vector.extract_strided_slice %138 {offsets = [0, 32], sizes = [2, 32], strides = [1, 1]} : vector<2x128xf32> to vector<2x32xf32>
    %142 = vector.extract_strided_slice %139 {offsets = [0, 64], sizes = [2, 32], strides = [1, 1]} : vector<2x128xf32> to vector<2x32xf32>
    %143 = vector.extract_strided_slice %138 {offsets = [0, 96], sizes = [2, 32], strides = [1, 1]} : vector<2x128xf32> to vector<2x32xf32>
    %144 = arith.mulf %141, %90 : vector<2x32xf32>
    %145 = arith.mulf %140, %142 : vector<2x32xf32>
    %146 = arith.addf %144, %145 : vector<2x32xf32>
    %147 = math.tanh %146 : vector<2x32xf32>
    %148 = arith.mulf %143, %147 : vector<2x32xf32>
    %149 = tpu.concatenate %148, %110 in 1 : vector<2x32xf32>, vector<2x32xf32> -> vector<2x64xf32>
    %cst_27 = arith.constant dense<0.000000e+00> : vector<2x128xf32>
    %150 = tpu.matmul %149, %8, %cst_27 {dimension_numbers = #tpu.dot_dimension_numbers<[1], [0], [0], [1], [0, 0, 1, 1], [], []>} : vector<2x64xf32>, vector<64x128xf32>, vector<2x128xf32> -> vector<2x128xf32>
    %151 = arith.addf %150, %12 : vector<2x128xf32>
    %152 = arith.negf %151 : vector<2x128xf32>
    %153 = math.exp %152 : vector<2x128xf32>
    %cst_28 = arith.constant 1.000000e+00 : f32
    %154 = vector.broadcast %cst_28 : f32 to vector<2x128xf32>
    %155 = arith.addf %154, %153 : vector<2x128xf32>
    %156 = arith.divf %154, %155 : vector<2x128xf32>
    %157 = math.tanh %151 : vector<2x128xf32>
    %158 = vector.extract_strided_slice %156 {offsets = [0, 0], sizes = [2, 32], strides = [1, 1]} : vector<2x128xf32> to vector<2x32xf32>
    %159 = vector.extract_strided_slice %156 {offsets = [0, 32], sizes = [2, 32], strides = [1, 1]} : vector<2x128xf32> to vector<2x32xf32>
    %160 = vector.extract_strided_slice %157 {offsets = [0, 64], sizes = [2, 32], strides = [1, 1]} : vector<2x128xf32> to vector<2x32xf32>
    %161 = vector.extract_strided_slice %156 {offsets = [0, 96], sizes = [2, 32], strides = [1, 1]} : vector<2x128xf32> to vector<2x32xf32>
    %162 = arith.mulf %159, %108 : vector<2x32xf32>
    %163 = arith.mulf %158, %160 : vector<2x32xf32>
    %164 = arith.addf %162, %163 : vector<2x32xf32>
    %165 = math.tanh %164 : vector<2x32xf32>
    %166 = arith.mulf %161, %165 : vector<2x32xf32>
    %167 = tpu.concatenate %166, %128 in 1 : vector<2x32xf32>, vector<2x32xf32> -> vector<2x64xf32>
    %cst_29 = arith.constant dense<0.000000e+00> : vector<2x128xf32>
    %168 = tpu.matmul %167, %9, %cst_29 {dimension_numbers = #tpu.dot_dimension_numbers<[1], [0], [0], [1], [0, 0, 1, 1], [], []>} : vector<2x64xf32>, vector<64x128xf32>, vector<2x128xf32> -> vector<2x128xf32>
    %169 = arith.addf %168, %15 : vector<2x128xf32>
    %170 = arith.negf %169 : vector<2x128xf32>
    %171 = math.exp %170 : vector<2x128xf32>
    %cst_30 = arith.constant 1.000000e+00 : f32
    %172 = vector.broadcast %cst_30 : f32 to vector<2x128xf32>
    %173 = arith.addf %172, %171 : vector<2x128xf32>
    %174 = arith.divf %172, %173 : vector<2x128xf32>
    %175 = math.tanh %169 : vector<2x128xf32>
    %176 = vector.extract_strided_slice %174 {offsets = [0, 0], sizes = [2, 32], strides = [1, 1]} : vector<2x128xf32> to vector<2x32xf32>
    %177 = vector.extract_strided_slice %174 {offsets = [0, 32], sizes = [2, 32], strides = [1, 1]} : vector<2x128xf32> to vector<2x32xf32>
    %178 = vector.extract_strided_slice %175 {offsets = [0, 64], sizes = [2, 32], strides = [1, 1]} : vector<2x128xf32> to vector<2x32xf32>
    %179 = vector.extract_strided_slice %174 {offsets = [0, 96], sizes = [2, 32], strides = [1, 1]} : vector<2x128xf32> to vector<2x32xf32>
    %180 = arith.mulf %177, %126 : vector<2x32xf32>
    %181 = arith.mulf %176, %178 : vector<2x32xf32>
    %182 = arith.addf %180, %181 : vector<2x32xf32>
    %183 = math.tanh %182 : vector<2x32xf32>
    %184 = arith.mulf %179, %183 : vector<2x32xf32>
    %185 = vector.extract_strided_slice %6 {offsets = [3, 0], sizes = [1, 128], strides = [1, 1]} : vector<16x128xf32> to vector<1x128xf32>
    %186 = vector.extract_strided_slice %6 {offsets = [11, 0], sizes = [1, 128], strides = [1, 1]} : vector<16x128xf32> to vector<1x128xf32>
    %187 = tpu.concatenate %185, %186 in 0 : vector<1x128xf32>, vector<1x128xf32> -> vector<2x128xf32>
    %cst_31 = arith.constant dense<0.000000e+00> : vector<2x128xf32>
    %188 = tpu.matmul %148, %7, %cst_31 {dimension_numbers = #tpu.dot_dimension_numbers<[1], [0], [0], [1], [0, 0, 1, 1], [], []>} : vector<2x32xf32>, vector<32x128xf32>, vector<2x128xf32> -> vector<2x128xf32>
    %189 = arith.addf %187, %188 : vector<2x128xf32>
    %190 = arith.negf %189 : vector<2x128xf32>
    %191 = math.exp %190 : vector<2x128xf32>
    %cst_32 = arith.constant 1.000000e+00 : f32
    %192 = vector.broadcast %cst_32 : f32 to vector<2x128xf32>
    %193 = arith.addf %192, %191 : vector<2x128xf32>
    %194 = arith.divf %192, %193 : vector<2x128xf32>
    %195 = math.tanh %189 : vector<2x128xf32>
    %196 = vector.extract_strided_slice %194 {offsets = [0, 0], sizes = [2, 32], strides = [1, 1]} : vector<2x128xf32> to vector<2x32xf32>
    %197 = vector.extract_strided_slice %194 {offsets = [0, 32], sizes = [2, 32], strides = [1, 1]} : vector<2x128xf32> to vector<2x32xf32>
    %198 = vector.extract_strided_slice %195 {offsets = [0, 64], sizes = [2, 32], strides = [1, 1]} : vector<2x128xf32> to vector<2x32xf32>
    %199 = vector.extract_strided_slice %194 {offsets = [0, 96], sizes = [2, 32], strides = [1, 1]} : vector<2x128xf32> to vector<2x32xf32>
    %200 = arith.mulf %197, %146 : vector<2x32xf32>
    %201 = arith.mulf %196, %198 : vector<2x32xf32>
    %202 = arith.addf %200, %201 : vector<2x32xf32>
    %203 = math.tanh %202 : vector<2x32xf32>
    %204 = arith.mulf %199, %203 : vector<2x32xf32>
    %205 = tpu.concatenate %204, %166 in 1 : vector<2x32xf32>, vector<2x32xf32> -> vector<2x64xf32>
    %cst_33 = arith.constant dense<0.000000e+00> : vector<2x128xf32>
    %206 = tpu.matmul %205, %8, %cst_33 {dimension_numbers = #tpu.dot_dimension_numbers<[1], [0], [0], [1], [0, 0, 1, 1], [], []>} : vector<2x64xf32>, vector<64x128xf32>, vector<2x128xf32> -> vector<2x128xf32>
    %207 = arith.addf %206, %12 : vector<2x128xf32>
    %208 = arith.negf %207 : vector<2x128xf32>
    %209 = math.exp %208 : vector<2x128xf32>
    %cst_34 = arith.constant 1.000000e+00 : f32
    %210 = vector.broadcast %cst_34 : f32 to vector<2x128xf32>
    %211 = arith.addf %210, %209 : vector<2x128xf32>
    %212 = arith.divf %210, %211 : vector<2x128xf32>
    %213 = math.tanh %207 : vector<2x128xf32>
    %214 = vector.extract_strided_slice %212 {offsets = [0, 0], sizes = [2, 32], strides = [1, 1]} : vector<2x128xf32> to vector<2x32xf32>
    %215 = vector.extract_strided_slice %212 {offsets = [0, 32], sizes = [2, 32], strides = [1, 1]} : vector<2x128xf32> to vector<2x32xf32>
    %216 = vector.extract_strided_slice %213 {offsets = [0, 64], sizes = [2, 32], strides = [1, 1]} : vector<2x128xf32> to vector<2x32xf32>
    %217 = vector.extract_strided_slice %212 {offsets = [0, 96], sizes = [2, 32], strides = [1, 1]} : vector<2x128xf32> to vector<2x32xf32>
    %218 = arith.mulf %215, %164 : vector<2x32xf32>
    %219 = arith.mulf %214, %216 : vector<2x32xf32>
    %220 = arith.addf %218, %219 : vector<2x32xf32>
    %221 = math.tanh %220 : vector<2x32xf32>
    %222 = arith.mulf %217, %221 : vector<2x32xf32>
    %223 = tpu.concatenate %222, %184 in 1 : vector<2x32xf32>, vector<2x32xf32> -> vector<2x64xf32>
    %cst_35 = arith.constant dense<0.000000e+00> : vector<2x128xf32>
    %224 = tpu.matmul %223, %9, %cst_35 {dimension_numbers = #tpu.dot_dimension_numbers<[1], [0], [0], [1], [0, 0, 1, 1], [], []>} : vector<2x64xf32>, vector<64x128xf32>, vector<2x128xf32> -> vector<2x128xf32>
    %225 = arith.addf %224, %15 : vector<2x128xf32>
    %226 = arith.negf %225 : vector<2x128xf32>
    %227 = math.exp %226 : vector<2x128xf32>
    %cst_36 = arith.constant 1.000000e+00 : f32
    %228 = vector.broadcast %cst_36 : f32 to vector<2x128xf32>
    %229 = arith.addf %228, %227 : vector<2x128xf32>
    %230 = arith.divf %228, %229 : vector<2x128xf32>
    %231 = math.tanh %225 : vector<2x128xf32>
    %232 = vector.extract_strided_slice %230 {offsets = [0, 0], sizes = [2, 32], strides = [1, 1]} : vector<2x128xf32> to vector<2x32xf32>
    %233 = vector.extract_strided_slice %230 {offsets = [0, 32], sizes = [2, 32], strides = [1, 1]} : vector<2x128xf32> to vector<2x32xf32>
    %234 = vector.extract_strided_slice %231 {offsets = [0, 64], sizes = [2, 32], strides = [1, 1]} : vector<2x128xf32> to vector<2x32xf32>
    %235 = vector.extract_strided_slice %230 {offsets = [0, 96], sizes = [2, 32], strides = [1, 1]} : vector<2x128xf32> to vector<2x32xf32>
    %236 = arith.mulf %233, %182 : vector<2x32xf32>
    %237 = arith.mulf %232, %234 : vector<2x32xf32>
    %238 = arith.addf %236, %237 : vector<2x32xf32>
    %239 = math.tanh %238 : vector<2x32xf32>
    %240 = arith.mulf %235, %239 : vector<2x32xf32>
    %241 = vector.extract_strided_slice %6 {offsets = [4, 0], sizes = [1, 128], strides = [1, 1]} : vector<16x128xf32> to vector<1x128xf32>
    %242 = vector.extract_strided_slice %6 {offsets = [12, 0], sizes = [1, 128], strides = [1, 1]} : vector<16x128xf32> to vector<1x128xf32>
    %243 = tpu.concatenate %241, %242 in 0 : vector<1x128xf32>, vector<1x128xf32> -> vector<2x128xf32>
    %cst_37 = arith.constant dense<0.000000e+00> : vector<2x128xf32>
    %244 = tpu.matmul %204, %7, %cst_37 {dimension_numbers = #tpu.dot_dimension_numbers<[1], [0], [0], [1], [0, 0, 1, 1], [], []>} : vector<2x32xf32>, vector<32x128xf32>, vector<2x128xf32> -> vector<2x128xf32>
    %245 = arith.addf %243, %244 : vector<2x128xf32>
    %246 = arith.negf %245 : vector<2x128xf32>
    %247 = math.exp %246 : vector<2x128xf32>
    %cst_38 = arith.constant 1.000000e+00 : f32
    %248 = vector.broadcast %cst_38 : f32 to vector<2x128xf32>
    %249 = arith.addf %248, %247 : vector<2x128xf32>
    %250 = arith.divf %248, %249 : vector<2x128xf32>
    %251 = math.tanh %245 : vector<2x128xf32>
    %252 = vector.extract_strided_slice %250 {offsets = [0, 0], sizes = [2, 32], strides = [1, 1]} : vector<2x128xf32> to vector<2x32xf32>
    %253 = vector.extract_strided_slice %250 {offsets = [0, 32], sizes = [2, 32], strides = [1, 1]} : vector<2x128xf32> to vector<2x32xf32>
    %254 = vector.extract_strided_slice %251 {offsets = [0, 64], sizes = [2, 32], strides = [1, 1]} : vector<2x128xf32> to vector<2x32xf32>
    %255 = vector.extract_strided_slice %250 {offsets = [0, 96], sizes = [2, 32], strides = [1, 1]} : vector<2x128xf32> to vector<2x32xf32>
    %256 = arith.mulf %253, %202 : vector<2x32xf32>
    %257 = arith.mulf %252, %254 : vector<2x32xf32>
    %258 = arith.addf %256, %257 : vector<2x32xf32>
    %259 = math.tanh %258 : vector<2x32xf32>
    %260 = arith.mulf %255, %259 : vector<2x32xf32>
    %261 = tpu.concatenate %260, %222 in 1 : vector<2x32xf32>, vector<2x32xf32> -> vector<2x64xf32>
    %cst_39 = arith.constant dense<0.000000e+00> : vector<2x128xf32>
    %262 = tpu.matmul %261, %8, %cst_39 {dimension_numbers = #tpu.dot_dimension_numbers<[1], [0], [0], [1], [0, 0, 1, 1], [], []>} : vector<2x64xf32>, vector<64x128xf32>, vector<2x128xf32> -> vector<2x128xf32>
    %263 = arith.addf %262, %12 : vector<2x128xf32>
    %264 = arith.negf %263 : vector<2x128xf32>
    %265 = math.exp %264 : vector<2x128xf32>
    %cst_40 = arith.constant 1.000000e+00 : f32
    %266 = vector.broadcast %cst_40 : f32 to vector<2x128xf32>
    %267 = arith.addf %266, %265 : vector<2x128xf32>
    %268 = arith.divf %266, %267 : vector<2x128xf32>
    %269 = math.tanh %263 : vector<2x128xf32>
    %270 = vector.extract_strided_slice %268 {offsets = [0, 0], sizes = [2, 32], strides = [1, 1]} : vector<2x128xf32> to vector<2x32xf32>
    %271 = vector.extract_strided_slice %268 {offsets = [0, 32], sizes = [2, 32], strides = [1, 1]} : vector<2x128xf32> to vector<2x32xf32>
    %272 = vector.extract_strided_slice %269 {offsets = [0, 64], sizes = [2, 32], strides = [1, 1]} : vector<2x128xf32> to vector<2x32xf32>
    %273 = vector.extract_strided_slice %268 {offsets = [0, 96], sizes = [2, 32], strides = [1, 1]} : vector<2x128xf32> to vector<2x32xf32>
    %274 = arith.mulf %271, %220 : vector<2x32xf32>
    %275 = arith.mulf %270, %272 : vector<2x32xf32>
    %276 = arith.addf %274, %275 : vector<2x32xf32>
    %277 = math.tanh %276 : vector<2x32xf32>
    %278 = arith.mulf %273, %277 : vector<2x32xf32>
    %279 = tpu.concatenate %278, %240 in 1 : vector<2x32xf32>, vector<2x32xf32> -> vector<2x64xf32>
    %cst_41 = arith.constant dense<0.000000e+00> : vector<2x128xf32>
    %280 = tpu.matmul %279, %9, %cst_41 {dimension_numbers = #tpu.dot_dimension_numbers<[1], [0], [0], [1], [0, 0, 1, 1], [], []>} : vector<2x64xf32>, vector<64x128xf32>, vector<2x128xf32> -> vector<2x128xf32>
    %281 = arith.addf %280, %15 : vector<2x128xf32>
    %282 = arith.negf %281 : vector<2x128xf32>
    %283 = math.exp %282 : vector<2x128xf32>
    %cst_42 = arith.constant 1.000000e+00 : f32
    %284 = vector.broadcast %cst_42 : f32 to vector<2x128xf32>
    %285 = arith.addf %284, %283 : vector<2x128xf32>
    %286 = arith.divf %284, %285 : vector<2x128xf32>
    %287 = math.tanh %281 : vector<2x128xf32>
    %288 = vector.extract_strided_slice %286 {offsets = [0, 0], sizes = [2, 32], strides = [1, 1]} : vector<2x128xf32> to vector<2x32xf32>
    %289 = vector.extract_strided_slice %286 {offsets = [0, 32], sizes = [2, 32], strides = [1, 1]} : vector<2x128xf32> to vector<2x32xf32>
    %290 = vector.extract_strided_slice %287 {offsets = [0, 64], sizes = [2, 32], strides = [1, 1]} : vector<2x128xf32> to vector<2x32xf32>
    %291 = vector.extract_strided_slice %286 {offsets = [0, 96], sizes = [2, 32], strides = [1, 1]} : vector<2x128xf32> to vector<2x32xf32>
    %292 = arith.mulf %289, %238 : vector<2x32xf32>
    %293 = arith.mulf %288, %290 : vector<2x32xf32>
    %294 = arith.addf %292, %293 : vector<2x32xf32>
    %295 = math.tanh %294 : vector<2x32xf32>
    %296 = arith.mulf %291, %295 : vector<2x32xf32>
    %297 = vector.extract_strided_slice %6 {offsets = [5, 0], sizes = [1, 128], strides = [1, 1]} : vector<16x128xf32> to vector<1x128xf32>
    %298 = vector.extract_strided_slice %6 {offsets = [13, 0], sizes = [1, 128], strides = [1, 1]} : vector<16x128xf32> to vector<1x128xf32>
    %299 = tpu.concatenate %297, %298 in 0 : vector<1x128xf32>, vector<1x128xf32> -> vector<2x128xf32>
    %cst_43 = arith.constant dense<0.000000e+00> : vector<2x128xf32>
    %300 = tpu.matmul %260, %7, %cst_43 {dimension_numbers = #tpu.dot_dimension_numbers<[1], [0], [0], [1], [0, 0, 1, 1], [], []>} : vector<2x32xf32>, vector<32x128xf32>, vector<2x128xf32> -> vector<2x128xf32>
    %301 = arith.addf %299, %300 : vector<2x128xf32>
    %302 = arith.negf %301 : vector<2x128xf32>
    %303 = math.exp %302 : vector<2x128xf32>
    %cst_44 = arith.constant 1.000000e+00 : f32
    %304 = vector.broadcast %cst_44 : f32 to vector<2x128xf32>
    %305 = arith.addf %304, %303 : vector<2x128xf32>
    %306 = arith.divf %304, %305 : vector<2x128xf32>
    %307 = math.tanh %301 : vector<2x128xf32>
    %308 = vector.extract_strided_slice %306 {offsets = [0, 0], sizes = [2, 32], strides = [1, 1]} : vector<2x128xf32> to vector<2x32xf32>
    %309 = vector.extract_strided_slice %306 {offsets = [0, 32], sizes = [2, 32], strides = [1, 1]} : vector<2x128xf32> to vector<2x32xf32>
    %310 = vector.extract_strided_slice %307 {offsets = [0, 64], sizes = [2, 32], strides = [1, 1]} : vector<2x128xf32> to vector<2x32xf32>
    %311 = vector.extract_strided_slice %306 {offsets = [0, 96], sizes = [2, 32], strides = [1, 1]} : vector<2x128xf32> to vector<2x32xf32>
    %312 = arith.mulf %309, %258 : vector<2x32xf32>
    %313 = arith.mulf %308, %310 : vector<2x32xf32>
    %314 = arith.addf %312, %313 : vector<2x32xf32>
    %315 = math.tanh %314 : vector<2x32xf32>
    %316 = arith.mulf %311, %315 : vector<2x32xf32>
    %317 = tpu.concatenate %316, %278 in 1 : vector<2x32xf32>, vector<2x32xf32> -> vector<2x64xf32>
    %cst_45 = arith.constant dense<0.000000e+00> : vector<2x128xf32>
    %318 = tpu.matmul %317, %8, %cst_45 {dimension_numbers = #tpu.dot_dimension_numbers<[1], [0], [0], [1], [0, 0, 1, 1], [], []>} : vector<2x64xf32>, vector<64x128xf32>, vector<2x128xf32> -> vector<2x128xf32>
    %319 = arith.addf %318, %12 : vector<2x128xf32>
    %320 = arith.negf %319 : vector<2x128xf32>
    %321 = math.exp %320 : vector<2x128xf32>
    %cst_46 = arith.constant 1.000000e+00 : f32
    %322 = vector.broadcast %cst_46 : f32 to vector<2x128xf32>
    %323 = arith.addf %322, %321 : vector<2x128xf32>
    %324 = arith.divf %322, %323 : vector<2x128xf32>
    %325 = math.tanh %319 : vector<2x128xf32>
    %326 = vector.extract_strided_slice %324 {offsets = [0, 0], sizes = [2, 32], strides = [1, 1]} : vector<2x128xf32> to vector<2x32xf32>
    %327 = vector.extract_strided_slice %324 {offsets = [0, 32], sizes = [2, 32], strides = [1, 1]} : vector<2x128xf32> to vector<2x32xf32>
    %328 = vector.extract_strided_slice %325 {offsets = [0, 64], sizes = [2, 32], strides = [1, 1]} : vector<2x128xf32> to vector<2x32xf32>
    %329 = vector.extract_strided_slice %324 {offsets = [0, 96], sizes = [2, 32], strides = [1, 1]} : vector<2x128xf32> to vector<2x32xf32>
    %330 = arith.mulf %327, %276 : vector<2x32xf32>
    %331 = arith.mulf %326, %328 : vector<2x32xf32>
    %332 = arith.addf %330, %331 : vector<2x32xf32>
    %333 = math.tanh %332 : vector<2x32xf32>
    %334 = arith.mulf %329, %333 : vector<2x32xf32>
    %335 = tpu.concatenate %334, %296 in 1 : vector<2x32xf32>, vector<2x32xf32> -> vector<2x64xf32>
    %cst_47 = arith.constant dense<0.000000e+00> : vector<2x128xf32>
    %336 = tpu.matmul %335, %9, %cst_47 {dimension_numbers = #tpu.dot_dimension_numbers<[1], [0], [0], [1], [0, 0, 1, 1], [], []>} : vector<2x64xf32>, vector<64x128xf32>, vector<2x128xf32> -> vector<2x128xf32>
    %337 = arith.addf %336, %15 : vector<2x128xf32>
    %338 = arith.negf %337 : vector<2x128xf32>
    %339 = math.exp %338 : vector<2x128xf32>
    %cst_48 = arith.constant 1.000000e+00 : f32
    %340 = vector.broadcast %cst_48 : f32 to vector<2x128xf32>
    %341 = arith.addf %340, %339 : vector<2x128xf32>
    %342 = arith.divf %340, %341 : vector<2x128xf32>
    %343 = math.tanh %337 : vector<2x128xf32>
    %344 = vector.extract_strided_slice %342 {offsets = [0, 0], sizes = [2, 32], strides = [1, 1]} : vector<2x128xf32> to vector<2x32xf32>
    %345 = vector.extract_strided_slice %342 {offsets = [0, 32], sizes = [2, 32], strides = [1, 1]} : vector<2x128xf32> to vector<2x32xf32>
    %346 = vector.extract_strided_slice %343 {offsets = [0, 64], sizes = [2, 32], strides = [1, 1]} : vector<2x128xf32> to vector<2x32xf32>
    %347 = vector.extract_strided_slice %342 {offsets = [0, 96], sizes = [2, 32], strides = [1, 1]} : vector<2x128xf32> to vector<2x32xf32>
    %348 = arith.mulf %345, %294 : vector<2x32xf32>
    %349 = arith.mulf %344, %346 : vector<2x32xf32>
    %350 = arith.addf %348, %349 : vector<2x32xf32>
    %351 = math.tanh %350 : vector<2x32xf32>
    %352 = arith.mulf %347, %351 : vector<2x32xf32>
    %353 = vector.extract_strided_slice %6 {offsets = [6, 0], sizes = [1, 128], strides = [1, 1]} : vector<16x128xf32> to vector<1x128xf32>
    %354 = vector.extract_strided_slice %6 {offsets = [14, 0], sizes = [1, 128], strides = [1, 1]} : vector<16x128xf32> to vector<1x128xf32>
    %355 = tpu.concatenate %353, %354 in 0 : vector<1x128xf32>, vector<1x128xf32> -> vector<2x128xf32>
    %cst_49 = arith.constant dense<0.000000e+00> : vector<2x128xf32>
    %356 = tpu.matmul %316, %7, %cst_49 {dimension_numbers = #tpu.dot_dimension_numbers<[1], [0], [0], [1], [0, 0, 1, 1], [], []>} : vector<2x32xf32>, vector<32x128xf32>, vector<2x128xf32> -> vector<2x128xf32>
    %357 = arith.addf %355, %356 : vector<2x128xf32>
    %358 = arith.negf %357 : vector<2x128xf32>
    %359 = math.exp %358 : vector<2x128xf32>
    %cst_50 = arith.constant 1.000000e+00 : f32
    %360 = vector.broadcast %cst_50 : f32 to vector<2x128xf32>
    %361 = arith.addf %360, %359 : vector<2x128xf32>
    %362 = arith.divf %360, %361 : vector<2x128xf32>
    %363 = math.tanh %357 : vector<2x128xf32>
    %364 = vector.extract_strided_slice %362 {offsets = [0, 0], sizes = [2, 32], strides = [1, 1]} : vector<2x128xf32> to vector<2x32xf32>
    %365 = vector.extract_strided_slice %362 {offsets = [0, 32], sizes = [2, 32], strides = [1, 1]} : vector<2x128xf32> to vector<2x32xf32>
    %366 = vector.extract_strided_slice %363 {offsets = [0, 64], sizes = [2, 32], strides = [1, 1]} : vector<2x128xf32> to vector<2x32xf32>
    %367 = vector.extract_strided_slice %362 {offsets = [0, 96], sizes = [2, 32], strides = [1, 1]} : vector<2x128xf32> to vector<2x32xf32>
    %368 = arith.mulf %365, %314 : vector<2x32xf32>
    %369 = arith.mulf %364, %366 : vector<2x32xf32>
    %370 = arith.addf %368, %369 : vector<2x32xf32>
    %371 = math.tanh %370 : vector<2x32xf32>
    %372 = arith.mulf %367, %371 : vector<2x32xf32>
    %373 = tpu.concatenate %372, %334 in 1 : vector<2x32xf32>, vector<2x32xf32> -> vector<2x64xf32>
    %cst_51 = arith.constant dense<0.000000e+00> : vector<2x128xf32>
    %374 = tpu.matmul %373, %8, %cst_51 {dimension_numbers = #tpu.dot_dimension_numbers<[1], [0], [0], [1], [0, 0, 1, 1], [], []>} : vector<2x64xf32>, vector<64x128xf32>, vector<2x128xf32> -> vector<2x128xf32>
    %375 = arith.addf %374, %12 : vector<2x128xf32>
    %376 = arith.negf %375 : vector<2x128xf32>
    %377 = math.exp %376 : vector<2x128xf32>
    %cst_52 = arith.constant 1.000000e+00 : f32
    %378 = vector.broadcast %cst_52 : f32 to vector<2x128xf32>
    %379 = arith.addf %378, %377 : vector<2x128xf32>
    %380 = arith.divf %378, %379 : vector<2x128xf32>
    %381 = math.tanh %375 : vector<2x128xf32>
    %382 = vector.extract_strided_slice %380 {offsets = [0, 0], sizes = [2, 32], strides = [1, 1]} : vector<2x128xf32> to vector<2x32xf32>
    %383 = vector.extract_strided_slice %380 {offsets = [0, 32], sizes = [2, 32], strides = [1, 1]} : vector<2x128xf32> to vector<2x32xf32>
    %384 = vector.extract_strided_slice %381 {offsets = [0, 64], sizes = [2, 32], strides = [1, 1]} : vector<2x128xf32> to vector<2x32xf32>
    %385 = vector.extract_strided_slice %380 {offsets = [0, 96], sizes = [2, 32], strides = [1, 1]} : vector<2x128xf32> to vector<2x32xf32>
    %386 = arith.mulf %383, %332 : vector<2x32xf32>
    %387 = arith.mulf %382, %384 : vector<2x32xf32>
    %388 = arith.addf %386, %387 : vector<2x32xf32>
    %389 = math.tanh %388 : vector<2x32xf32>
    %390 = arith.mulf %385, %389 : vector<2x32xf32>
    %391 = tpu.concatenate %390, %352 in 1 : vector<2x32xf32>, vector<2x32xf32> -> vector<2x64xf32>
    %cst_53 = arith.constant dense<0.000000e+00> : vector<2x128xf32>
    %392 = tpu.matmul %391, %9, %cst_53 {dimension_numbers = #tpu.dot_dimension_numbers<[1], [0], [0], [1], [0, 0, 1, 1], [], []>} : vector<2x64xf32>, vector<64x128xf32>, vector<2x128xf32> -> vector<2x128xf32>
    %393 = arith.addf %392, %15 : vector<2x128xf32>
    %394 = arith.negf %393 : vector<2x128xf32>
    %395 = math.exp %394 : vector<2x128xf32>
    %cst_54 = arith.constant 1.000000e+00 : f32
    %396 = vector.broadcast %cst_54 : f32 to vector<2x128xf32>
    %397 = arith.addf %396, %395 : vector<2x128xf32>
    %398 = arith.divf %396, %397 : vector<2x128xf32>
    %399 = math.tanh %393 : vector<2x128xf32>
    %400 = vector.extract_strided_slice %398 {offsets = [0, 0], sizes = [2, 32], strides = [1, 1]} : vector<2x128xf32> to vector<2x32xf32>
    %401 = vector.extract_strided_slice %398 {offsets = [0, 32], sizes = [2, 32], strides = [1, 1]} : vector<2x128xf32> to vector<2x32xf32>
    %402 = vector.extract_strided_slice %399 {offsets = [0, 64], sizes = [2, 32], strides = [1, 1]} : vector<2x128xf32> to vector<2x32xf32>
    %403 = vector.extract_strided_slice %398 {offsets = [0, 96], sizes = [2, 32], strides = [1, 1]} : vector<2x128xf32> to vector<2x32xf32>
    %404 = arith.mulf %401, %350 : vector<2x32xf32>
    %405 = arith.mulf %400, %402 : vector<2x32xf32>
    %406 = arith.addf %404, %405 : vector<2x32xf32>
    %407 = math.tanh %406 : vector<2x32xf32>
    %408 = arith.mulf %403, %407 : vector<2x32xf32>
    %409 = vector.extract_strided_slice %6 {offsets = [7, 0], sizes = [1, 128], strides = [1, 1]} : vector<16x128xf32> to vector<1x128xf32>
    %410 = vector.extract_strided_slice %6 {offsets = [15, 0], sizes = [1, 128], strides = [1, 1]} : vector<16x128xf32> to vector<1x128xf32>
    %411 = tpu.concatenate %409, %410 in 0 : vector<1x128xf32>, vector<1x128xf32> -> vector<2x128xf32>
    %cst_55 = arith.constant dense<0.000000e+00> : vector<2x128xf32>
    %412 = tpu.matmul %372, %7, %cst_55 {dimension_numbers = #tpu.dot_dimension_numbers<[1], [0], [0], [1], [0, 0, 1, 1], [], []>} : vector<2x32xf32>, vector<32x128xf32>, vector<2x128xf32> -> vector<2x128xf32>
    %413 = arith.addf %411, %412 : vector<2x128xf32>
    %414 = arith.negf %413 : vector<2x128xf32>
    %415 = math.exp %414 : vector<2x128xf32>
    %cst_56 = arith.constant 1.000000e+00 : f32
    %416 = vector.broadcast %cst_56 : f32 to vector<2x128xf32>
    %417 = arith.addf %416, %415 : vector<2x128xf32>
    %418 = arith.divf %416, %417 : vector<2x128xf32>
    %419 = math.tanh %413 : vector<2x128xf32>
    %420 = vector.extract_strided_slice %418 {offsets = [0, 0], sizes = [2, 32], strides = [1, 1]} : vector<2x128xf32> to vector<2x32xf32>
    %421 = vector.extract_strided_slice %418 {offsets = [0, 32], sizes = [2, 32], strides = [1, 1]} : vector<2x128xf32> to vector<2x32xf32>
    %422 = vector.extract_strided_slice %419 {offsets = [0, 64], sizes = [2, 32], strides = [1, 1]} : vector<2x128xf32> to vector<2x32xf32>
    %423 = vector.extract_strided_slice %418 {offsets = [0, 96], sizes = [2, 32], strides = [1, 1]} : vector<2x128xf32> to vector<2x32xf32>
    %424 = arith.mulf %421, %370 : vector<2x32xf32>
    %425 = arith.mulf %420, %422 : vector<2x32xf32>
    %426 = arith.addf %424, %425 : vector<2x32xf32>
    %427 = math.tanh %426 : vector<2x32xf32>
    %428 = arith.mulf %423, %427 : vector<2x32xf32>
    %429 = tpu.concatenate %428, %390 in 1 : vector<2x32xf32>, vector<2x32xf32> -> vector<2x64xf32>
    %cst_57 = arith.constant dense<0.000000e+00> : vector<2x128xf32>
    %430 = tpu.matmul %429, %8, %cst_57 {dimension_numbers = #tpu.dot_dimension_numbers<[1], [0], [0], [1], [0, 0, 1, 1], [], []>} : vector<2x64xf32>, vector<64x128xf32>, vector<2x128xf32> -> vector<2x128xf32>
    %431 = arith.addf %430, %12 : vector<2x128xf32>
    %432 = arith.negf %431 : vector<2x128xf32>
    %433 = math.exp %432 : vector<2x128xf32>
    %cst_58 = arith.constant 1.000000e+00 : f32
    %434 = vector.broadcast %cst_58 : f32 to vector<2x128xf32>
    %435 = arith.addf %434, %433 : vector<2x128xf32>
    %436 = arith.divf %434, %435 : vector<2x128xf32>
    %437 = math.tanh %431 : vector<2x128xf32>
    %438 = vector.extract_strided_slice %436 {offsets = [0, 0], sizes = [2, 32], strides = [1, 1]} : vector<2x128xf32> to vector<2x32xf32>
    %439 = vector.extract_strided_slice %436 {offsets = [0, 32], sizes = [2, 32], strides = [1, 1]} : vector<2x128xf32> to vector<2x32xf32>
    %440 = vector.extract_strided_slice %437 {offsets = [0, 64], sizes = [2, 32], strides = [1, 1]} : vector<2x128xf32> to vector<2x32xf32>
    %441 = vector.extract_strided_slice %436 {offsets = [0, 96], sizes = [2, 32], strides = [1, 1]} : vector<2x128xf32> to vector<2x32xf32>
    %442 = arith.mulf %439, %388 : vector<2x32xf32>
    %443 = arith.mulf %438, %440 : vector<2x32xf32>
    %444 = arith.addf %442, %443 : vector<2x32xf32>
    %445 = math.tanh %444 : vector<2x32xf32>
    %446 = arith.mulf %441, %445 : vector<2x32xf32>
    %447 = tpu.concatenate %446, %408 in 1 : vector<2x32xf32>, vector<2x32xf32> -> vector<2x64xf32>
    %cst_59 = arith.constant dense<0.000000e+00> : vector<2x128xf32>
    %448 = tpu.matmul %447, %9, %cst_59 {dimension_numbers = #tpu.dot_dimension_numbers<[1], [0], [0], [1], [0, 0, 1, 1], [], []>} : vector<2x64xf32>, vector<64x128xf32>, vector<2x128xf32> -> vector<2x128xf32>
    %449 = arith.addf %448, %15 : vector<2x128xf32>
    %450 = arith.negf %449 : vector<2x128xf32>
    %451 = math.exp %450 : vector<2x128xf32>
    %cst_60 = arith.constant 1.000000e+00 : f32
    %452 = vector.broadcast %cst_60 : f32 to vector<2x128xf32>
    %453 = arith.addf %452, %451 : vector<2x128xf32>
    %454 = arith.divf %452, %453 : vector<2x128xf32>
    %455 = math.tanh %449 : vector<2x128xf32>
    %456 = vector.extract_strided_slice %454 {offsets = [0, 0], sizes = [2, 32], strides = [1, 1]} : vector<2x128xf32> to vector<2x32xf32>
    %457 = vector.extract_strided_slice %454 {offsets = [0, 32], sizes = [2, 32], strides = [1, 1]} : vector<2x128xf32> to vector<2x32xf32>
    %458 = vector.extract_strided_slice %455 {offsets = [0, 64], sizes = [2, 32], strides = [1, 1]} : vector<2x128xf32> to vector<2x32xf32>
    %459 = vector.extract_strided_slice %454 {offsets = [0, 96], sizes = [2, 32], strides = [1, 1]} : vector<2x128xf32> to vector<2x32xf32>
    %460 = arith.mulf %457, %406 : vector<2x32xf32>
    %461 = arith.mulf %456, %458 : vector<2x32xf32>
    %462 = arith.addf %460, %461 : vector<2x32xf32>
    %463 = math.tanh %462 : vector<2x32xf32>
    %464 = arith.mulf %459, %463 : vector<2x32xf32>
    %465 = vector.extract_strided_slice %72 {offsets = [0, 0], sizes = [1, 32], strides = [1, 1]} : vector<2x32xf32> to vector<1x32xf32>
    %466 = vector.extract_strided_slice %128 {offsets = [0, 0], sizes = [1, 32], strides = [1, 1]} : vector<2x32xf32> to vector<1x32xf32>
    %467 = vector.extract_strided_slice %184 {offsets = [0, 0], sizes = [1, 32], strides = [1, 1]} : vector<2x32xf32> to vector<1x32xf32>
    %468 = vector.extract_strided_slice %240 {offsets = [0, 0], sizes = [1, 32], strides = [1, 1]} : vector<2x32xf32> to vector<1x32xf32>
    %469 = vector.extract_strided_slice %296 {offsets = [0, 0], sizes = [1, 32], strides = [1, 1]} : vector<2x32xf32> to vector<1x32xf32>
    %470 = vector.extract_strided_slice %352 {offsets = [0, 0], sizes = [1, 32], strides = [1, 1]} : vector<2x32xf32> to vector<1x32xf32>
    %471 = vector.extract_strided_slice %408 {offsets = [0, 0], sizes = [1, 32], strides = [1, 1]} : vector<2x32xf32> to vector<1x32xf32>
    %472 = vector.extract_strided_slice %464 {offsets = [0, 0], sizes = [1, 32], strides = [1, 1]} : vector<2x32xf32> to vector<1x32xf32>
    %473 = tpu.concatenate %465, %466, %467, %468, %469, %470, %471, %472 in 0 : vector<1x32xf32>, vector<1x32xf32>, vector<1x32xf32>, vector<1x32xf32>, vector<1x32xf32>, vector<1x32xf32>, vector<1x32xf32>, vector<1x32xf32> -> vector<8x32xf32>
    %474 = vector.extract_strided_slice %72 {offsets = [1, 0], sizes = [1, 32], strides = [1, 1]} : vector<2x32xf32> to vector<1x32xf32>
    %475 = vector.extract_strided_slice %128 {offsets = [1, 0], sizes = [1, 32], strides = [1, 1]} : vector<2x32xf32> to vector<1x32xf32>
    %476 = vector.extract_strided_slice %184 {offsets = [1, 0], sizes = [1, 32], strides = [1, 1]} : vector<2x32xf32> to vector<1x32xf32>
    %477 = vector.extract_strided_slice %240 {offsets = [1, 0], sizes = [1, 32], strides = [1, 1]} : vector<2x32xf32> to vector<1x32xf32>
    %478 = vector.extract_strided_slice %296 {offsets = [1, 0], sizes = [1, 32], strides = [1, 1]} : vector<2x32xf32> to vector<1x32xf32>
    %479 = vector.extract_strided_slice %352 {offsets = [1, 0], sizes = [1, 32], strides = [1, 1]} : vector<2x32xf32> to vector<1x32xf32>
    %480 = vector.extract_strided_slice %408 {offsets = [1, 0], sizes = [1, 32], strides = [1, 1]} : vector<2x32xf32> to vector<1x32xf32>
    %481 = vector.extract_strided_slice %464 {offsets = [1, 0], sizes = [1, 32], strides = [1, 1]} : vector<2x32xf32> to vector<1x32xf32>
    %482 = tpu.concatenate %474, %475, %476, %477, %478, %479, %480, %481 in 0 : vector<1x32xf32>, vector<1x32xf32>, vector<1x32xf32>, vector<1x32xf32>, vector<1x32xf32>, vector<1x32xf32>, vector<1x32xf32>, vector<1x32xf32> -> vector<8x32xf32>
    %483 = tpu.concatenate %473, %482 in 0 : vector<8x32xf32>, vector<8x32xf32> -> vector<16x32xf32>
    %c0_61 = arith.constant 0 : index
    %c0_62 = arith.constant 0 : index
    %484 = vector.load %arg4[%c0_61, %c0_62] : memref<32x8xf32, #tpu.memory_space<vmem>>, vector<32x8xf32>
    %cst_63 = arith.constant dense<0.000000e+00> : vector<16x8xf32>
    %485 = tpu.matmul %483, %484, %cst_63 {dimension_numbers = #tpu.dot_dimension_numbers<[1], [0], [0], [1], [0, 0, 1, 1], [], []>} : vector<16x32xf32>, vector<32x8xf32>, vector<16x8xf32> -> vector<16x8xf32>
    %c0_64 = arith.constant 0 : index
    %c0_65 = arith.constant 0 : index
    %486 = vector.load %arg5[%c0_64, %c0_65] : memref<1x8xf32, #tpu.memory_space<vmem>>, vector<1x8xf32>
    %487 = vector.broadcast %486 : vector<1x8xf32> to vector<16x8xf32>
    %488 = arith.addf %485, %487 : vector<16x8xf32>
    %489 = vector.shape_cast %488 : vector<16x8xf32> to vector<2x8x8xf32>
    %c0_66 = arith.constant 0 : index
    %c0_67 = arith.constant 0 : index
    %c0_68 = arith.constant 0 : index
    %490 = vector.load %arg6[%c0_66, %c0_67, %c0_68] : memref<2x8x8xf32, #tpu.memory_space<vmem>>, vector<2x8x8xf32>
    tpu.vector_store %arg6[%c0_66, %c0_67, %c0_68], %489 {strides = array<i32>} : memref<2x8x8xf32, #tpu.memory_space<vmem>>, vector<2x8x8xf32>,
    return
  }
}

</mosaic_0001>

<llo_original>
// kernel: tpu_custom_call.1
$region0: #{tpu_custom_call.1}
  #allocation0 [shape = 'u32[]', space=smem, size = 0x4, offset = 0x4, fixed_abs, tag = 'smem constant byte address 0x4 - core index']
  #allocation1 [shape = 'u32[72,128]{1,0:T(1,128)}', space=vmem, size = 0x9000, scoped, tag = 'internal scratch']
  %s0 = inlined_call_operand.hbm [shape: f32[2,8,1280], index: 0, kind: input, shape index: {}]
  %s1 = inlined_call_operand.hbm [shape: f32[1280,128], index: 1, kind: input, shape index: {}]
  %s2 = inlined_call_operand.hbm [shape: f32[160,128], index: 2, kind: input, shape index: {}]
  %s3 = inlined_call_operand.vmem [shape: f32[3,128], index: 3, kind: input, shape index: {}]
  %s4 = inlined_call_operand.vmem [shape: f32[32,8], index: 4, kind: input, shape index: {}]
  %s5 = inlined_call_operand.vmem [shape: f32[1,8], index: 5, kind: input, shape index: {}]
  %s6 = inlined_call_operand.hbm [shape: f32[2,8,8], index: 6, kind: output, shape index: {}]
  %s7 = sld [smem:[#allocation0]]
  $region46: #{tpu_custom_call.1} parent=0
    _
  %s9 = ssub.s32 1, %s7
  %s10 = scalar_select 0, %s9, %s7
  $region1: #{tpu_custom_call.1} parent=0
    #allocation2 [shape = 'u8[81920]{0}', space=vmem, size = 0x14000, scoped, tag = 'input window, operand 0, single buffered']
    #allocation3 [shape = 's32[1]{0}', space=sflag, size = 0x4, scoped, tag = 'scoped memory for tpu_custom_call.1']
    #allocation4 [shape = 's32[1]{0}', space=sflag, size = 0x4, scoped, tag = 'scoped memory for tpu_custom_call.1']
    #allocation5 [shape = 'u8[655360]{0}', space=vmem, size = 0xa0000, scoped, tag = 'input window, operand 1, single buffered']
    #allocation6 [shape = 's32[1]{0}', space=sflag, size = 0x4, scoped, tag = 'scoped memory for tpu_custom_call.1']
    #allocation7 [shape = 'u8[81920]{0}', space=vmem, size = 0x14000, scoped, tag = 'input window, operand 2, single buffered']
    #allocation8 [shape = 'u8[8192]{0}', space=vmem, size = 0x2000, scoped, tag = 'output window, operand 0, single buffered']
    %11 = vsyncpa [#allocation3], 0
    %12 = vsyncpa [#allocation6], 0
    %13 = vsyncpa [#allocation4], 0
    // Predicated region
    $region2: #{tpu_custom_call.1} parent=1 // pred_check
      _
    $region3: #{tpu_custom_call.1} parent=1 // pred_check_branch
      %15 = sbr.rel (0) target = $region5
    $region4: #{tpu_custom_call.1} parent=1 // pred_region
      %17 = vsyncadd [#allocation3], 0
      %s18 = sshll.u32 %s0, 4
      %s19 = int_to_ptr.hbm [resolvable:$true] %s18
      %s20 = sshll.u32 [#allocation2], 4
      %s21 = int_to_ptr.vmem [resolvable:$true] %s20
      %26 = dma.hbm_to_vmem [thread:$0]  %s19, 2560, %s21, [#allocation3], 1280, 1280, 80
    $region5: #{tpu_custom_call.1} parent=1 // pred_fallthru
      _
    // Predicated region
    $region6: #{tpu_custom_call.1} parent=1 // pred_check
      _
    $region7: #{tpu_custom_call.1} parent=1 // pred_check_branch
      %28 = sbr.rel (0) target = $region9
    $region8: #{tpu_custom_call.1} parent=1 // pred_region
      %30 = vsyncadd [#allocation6], 0
      %s31 = sshll.u32 %s1, 4
      %s32 = int_to_ptr.hbm [resolvable:$true] %s31
      %s33 = sshll.u32 [#allocation5], 4
      %s34 = int_to_ptr.vmem [resolvable:$true] %s33
      %39 = dma.hbm_to_vmem [thread:$0]  %s32, 20480, %s34, [#allocation6], 128, 128, 8
    $region9: #{tpu_custom_call.1} parent=1 // pred_fallthru
      _
    // Predicated region
    $region10: #{tpu_custom_call.1} parent=1 // pred_check
      _
    $region11: #{tpu_custom_call.1} parent=1 // pred_check_branch
      %41 = sbr.rel (0) target = $region13
    $region12: #{tpu_custom_call.1} parent=1 // pred_region
      %43 = vsyncadd [#allocation6], 0
      %s44 = sshll.u32 %s2, 4
      %s45 = int_to_ptr.hbm [resolvable:$true] %s44
      %s46 = sshll.u32 [#allocation7], 4
      %s47 = int_to_ptr.vmem [resolvable:$true] %s46
      %52 = dma.hbm_to_vmem [thread:$0]  %s45, 2560, %s47, [#allocation6], 128, 128, 8
    $region13: #{tpu_custom_call.1} parent=1 // pred_fallthru
      _
    // Predicated region
    $region14: #{tpu_custom_call.1} parent=1 // pred_check
      _
    $region15: #{tpu_custom_call.1} parent=1 // pred_check_branch
      %54 = sbr.rel (0) target = $region17
    $region16: #{tpu_custom_call.1} parent=1 // pred_region
      _
    $region17: #{tpu_custom_call.1} parent=1 // pred_fallthru
      _
    // Predicated region
    $region18: #{tpu_custom_call.1} parent=1 // pred_check
      _
    $region19: #{tpu_custom_call.1} parent=1 // pred_check_branch
      %56 = sbr.rel (0) target = $region21
    $region20: #{tpu_custom_call.1} parent=1 // pred_region
      _
    $region21: #{tpu_custom_call.1} parent=1 // pred_fallthru
      _
    // Predicated region
    $region22: #{tpu_custom_call.1} parent=1 // pred_check
      _
    $region23: #{tpu_custom_call.1} parent=1 // pred_check_branch
      %58 = sbr.rel (0) target = $region25
    $region24: #{tpu_custom_call.1} parent=1 // pred_region
      _
    $region25: #{tpu_custom_call.1} parent=1 // pred_fallthru
      _
    // Predicated region
    $region26: #{tpu_custom_call.1} parent=1 // pred_check
      _
    $region27: #{tpu_custom_call.1} parent=1 // pred_check_branch
      %60 = sbr.rel (0) target = $region29
    $region28: #{tpu_custom_call.1} parent=1 // pred_region
      %62 = dma.done [#allocation3], 2560
    $region29: #{tpu_custom_call.1} parent=1 // pred_fallthru
      _
    // Predicated region
    $region30: #{tpu_custom_call.1} parent=1 // pred_check
      _
    $region31: #{tpu_custom_call.1} parent=1 // pred_check_branch
      %64 = sbr.rel (0) target = $region33
    $region32: #{tpu_custom_call.1} parent=1 // pred_region
      %66 = dma.done [#allocation6], 20480
    $region33: #{tpu_custom_call.1} parent=1 // pred_fallthru
      _
    // Predicated region
    $region34: #{tpu_custom_call.1} parent=1 // pred_check
      _
    $region35: #{tpu_custom_call.1} parent=1 // pred_check_branch
      %68 = sbr.rel (0) target = $region37
    $region36: #{tpu_custom_call.1} parent=1 // pred_region
      %70 = dma.done [#allocation6], 2560
    $region37: #{tpu_custom_call.1} parent=1 // pred_fallthru
      _
    %v71 = vld [vmem:[#allocation2] sm:$0xff]
    %v72 = vld [vmem:[#allocation2 + $0x8] sm:$0xff]
    %v73 = vld [vmem:[#allocation2 + $0x10] sm:$0xff]
    %v74 = vld [vmem:[#allocation2 + $0x18] sm:$0xff]
    %v75 = vld [vmem:[#allocation2 + $0x20] sm:$0xff]
    %v76 = vld [vmem:[#allocation2 + $0x28] sm:$0xff]
    %v77 = vld [vmem:[#allocation2 + $0x30] sm:$0xff]
    %v78 = vld [vmem:[#allocation2 + $0x38] sm:$0xff]
    %v79 = vld [vmem:[#allocation2 + $0x40] sm:$0xff]
    %v80 = vld [vmem:[#allocation2 + $0x48] sm:$0xff]
    %v81 = vld [vmem:[#allocation2 + $0x50] sm:$0xff]
    %v82 = vld [vmem:[#allocation2 + $0x58] sm:$0xff]
    %v83 = vld [vmem:[#allocation2 + $0x60] sm:$0xff]
    %v84 = vld [vmem:[#allocation2 + $0x68] sm:$0xff]
    %v85 = vld [vmem:[#allocation2 + $0x70] sm:$0xff]
    %v86 = vld [vmem:[#allocation2 + $0x78] sm:$0xff]
    %v87 = vld [vmem:[#allocation2 + $0x80] sm:$0xff]
    %v88 = vld [vmem:[#allocation2 + $0x88] sm:$0xff]
    %v89 = vld [vmem:[#allocation2 + $0x90] sm:$0xff]
    %v90 = vld [vmem:[#allocation2 + $0x98] sm:$0xff]
    %v91 = vld [vmem:[#allocation5] sm:$0xff]
    %v92 = vld [vmem:[#allocation5 + $0x8] sm:$0xff]
    %v93 = vld [vmem:[#allocation5 + $0x10] sm:$0xff]
    %v94 = vld [vmem:[#allocation5 + $0x18] sm:$0xff]
    %v95 = vld [vmem:[#allocation5 + $0x20] sm:$0xff]
    %v96 = vld [vmem:[#allocation5 + $0x28] sm:$0xff]
    %v97 = vld [vmem:[#allocation5 + $0x30] sm:$0xff]
    %v98 = vld [vmem:[#allocation5 + $0x38] sm:$0xff]
    %v99 = vld [vmem:[#allocation5 + $0x40] sm:$0xff]
    %v100 = vld [vmem:[#allocation5 + $0x48] sm:$0xff]
    %v101 = vld [vmem:[#allocation5 + $0x50] sm:$0xff]
    %v102 = vld [vmem:[#allocation5 + $0x58] sm:$0xff]
    %v103 = vld [vmem:[#allocation5 + $0x60] sm:$0xff]
    %v104 = vld [vmem:[#allocation5 + $0x68] sm:$0xff]
    %v105 = vld [vmem:[#allocation5 + $0x70] sm:$0xff]
    %v106 = vld [vmem:[#allocation5 + $0x78] sm:$0xff]
    %v107 = vld [vmem:[#allocation5 + $0x80] sm:$0xff]
    %v108 = vld [vmem:[#allocation5 + $0x88] sm:$0xff]
    %v109 = vld [vmem:[#allocation5 + $0x90] sm:$0xff]
    %v110 = vld [vmem:[#allocation5 + $0x98] sm:$0xff]
    %v111 = vld [vmem:[#allocation5 + $0xa0] sm:$0xff]
    %v112 = vld [vmem:[#allocation5 + $0xa8] sm:$0xff]
    %v113 = vld [vmem:[#allocation5 + $0xb0] sm:$0xff]
    %v114 = vld [vmem:[#allocation5 + $0xb8] sm:$0xff]
    %v115 = vld [vmem:[#allocation5 + $0xc0] sm:$0xff]
    %v116 = vld [vmem:[#allocation5 + $0xc8] sm:$0xff]
    %v117 = vld [vmem:[#allocation5 + $0xd0] sm:$0xff]
    %v118 = vld [vmem:[#allocation5 + $0xd8] sm:$0xff]
    %v119 = vld [vmem:[#allocation5 + $0xe0] sm:$0xff]
    %v120 = vld [vmem:[#allocation5 + $0xe8] sm:$0xff]
    %v121 = vld [vmem:[#allocation5 + $0xf0] sm:$0xff]
    %v122 = vld [vmem:[#allocation5 + $0xf8] sm:$0xff]
    %v123 = vld [vmem:[#allocation5 + $0x100] sm:$0xff]
    %v124 = vld [vmem:[#allocation5 + $0x108] sm:$0xff]
    %v125 = vld [vmem:[#allocation5 + $0x110] sm:$0xff]
    %v126 = vld [vmem:[#allocation5 + $0x118] sm:$0xff]
    %v127 = vld [vmem:[#allocation5 + $0x120] sm:$0xff]
    %v128 = vld [vmem:[#allocation5 + $0x128] sm:$0xff]
    %v129 = vld [vmem:[#allocation5 + $0x130] sm:$0xff]
    %v130 = vld [vmem:[#allocation5 + $0x138] sm:$0xff]
    %v131 = vld [vmem:[#allocation5 + $0x140] sm:$0xff]
    %v132 = vld [vmem:[#allocation5 + $0x148] sm:$0xff]
    %v133 = vld [vmem:[#allocation5 + $0x150] sm:$0xff]
    %v134 = vld [vmem:[#allocation5 + $0x158] sm:$0xff]
    %v135 = vld [vmem:[#allocation5 + $0x160] sm:$0xff]
    %v136 = vld [vmem:[#allocation5 + $0x168] sm:$0xff]
    %v137 = vld [vmem:[#allocation5 + $0x170] sm:$0xff]
    %v138 = vld [vmem:[#allocation5 + $0x178] sm:$0xff]
    %v139 = vld [vmem:[#allocation5 + $0x180] sm:$0xff]
    %v140 = vld [vmem:[#allocation5 + $0x188] sm:$0xff]
    %v141 = vld [vmem:[#allocation5 + $0x190] sm:$0xff]
    %v142 = vld [vmem:[#allocation5 + $0x198] sm:$0xff]
    %v143 = vld [vmem:[#allocation5 + $0x1a0] sm:$0xff]
    %v144 = vld [vmem:[#allocation5 + $0x1a8] sm:$0xff]
    %v145 = vld [vmem:[#allocation5 + $0x1b0] sm:$0xff]
    %v146 = vld [vmem:[#allocation5 + $0x1b8] sm:$0xff]
    %v147 = vld [vmem:[#allocation5 + $0x1c0] sm:$0xff]
    %v148 = vld [vmem:[#allocation5 + $0x1c8] sm:$0xff]
    %v149 = vld [vmem:[#allocation5 + $0x1d0] sm:$0xff]
    %v150 = vld [vmem:[#allocation5 + $0x1d8] sm:$0xff]
    %v151 = vld [vmem:[#allocation5 + $0x1e0] sm:$0xff]
    %v152 = vld [vmem:[#allocation5 + $0x1e8] sm:$0xff]
    %v153 = vld [vmem:[#allocation5 + $0x1f0] sm:$0xff]
    %v154 = vld [vmem:[#allocation5 + $0x1f8] sm:$0xff]
    %v155 = vld [vmem:[#allocation5 + $0x200] sm:$0xff]
    %v156 = vld [vmem:[#allocation5 + $0x208] sm:$0xff]
    %v157 = vld [vmem:[#allocation5 + $0x210] sm:$0xff]
    %v158 = vld [vmem:[#allocation5 + $0x218] sm:$0xff]
    %v159 = vld [vmem:[#allocation5 + $0x220] sm:$0xff]
    %v160 = vld [vmem:[#allocation5 + $0x228] sm:$0xff]
    %v161 = vld [vmem:[#allocation5 + $0x230] sm:$0xff]
    %v162 = vld [vmem:[#allocation5 + $0x238] sm:$0xff]
    %v163 = vld [vmem:[#allocation5 + $0x240] sm:$0xff]
    %v164 = vld [vmem:[#allocation5 + $0x248] sm:$0xff]
    %v165 = vld [vmem:[#allocation5 + $0x250] sm:$0xff]
    %v166 = vld [vmem:[#allocation5 + $0x258] sm:$0xff]
    %v167 = vld [vmem:[#allocation5 + $0x260] sm:$0xff]
    %v168 = vld [vmem:[#allocation5 + $0x268] sm:$0xff]
    %v169 = vld [vmem:[#allocation5 + $0x270] sm:$0xff]
    %v170 = vld [vmem:[#allocation5 + $0x278] sm:$0xff]
    %v171 = vld [vmem:[#allocation5 + $0x280] sm:$0xff]
    %v172 = vld [vmem:[#allocation5 + $0x288] sm:$0xff]
    %v173 = vld [vmem:[#allocation5 + $0x290] sm:$0xff]
    %v174 = vld [vmem:[#allocation5 + $0x298] sm:$0xff]
    %v175 = vld [vmem:[#allocation5 + $0x2a0] sm:$0xff]
    %v176 = vld [vmem:[#allocation5 + $0x2a8] sm:$0xff]
    %v177 = vld [vmem:[#allocation5 + $0x2b0] sm:$0xff]
    %v178 = vld [vmem:[#allocation5 + $0x2b8] sm:$0xff]
    %v179 = vld [vmem:[#allocation5 + $0x2c0] sm:$0xff]
    %v180 = vld [vmem:[#allocation5 + $0x2c8] sm:$0xff]
    %v181 = vld [vmem:[#allocation5 + $0x2d0] sm:$0xff]
    %v182 = vld [vmem:[#allocation5 + $0x2d8] sm:$0xff]
    %v183 = vld [vmem:[#allocation5 + $0x2e0] sm:$0xff]
    %v184 = vld [vmem:[#allocation5 + $0x2e8] sm:$0xff]
    %v185 = vld [vmem:[#allocation5 + $0x2f0] sm:$0xff]
    %v186 = vld [vmem:[#allocation5 + $0x2f8] sm:$0xff]
    %v187 = vld [vmem:[#allocation5 + $0x300] sm:$0xff]
    %v188 = vld [vmem:[#allocation5 + $0x308] sm:$0xff]
    %v189 = vld [vmem:[#allocation5 + $0x310] sm:$0xff]
    %v190 = vld [vmem:[#allocation5 + $0x318] sm:$0xff]
    %v191 = vld [vmem:[#allocation5 + $0x320] sm:$0xff]
    %v192 = vld [vmem:[#allocation5 + $0x328] sm:$0xff]
    %v193 = vld [vmem:[#allocation5 + $0x330] sm:$0xff]
    %v194 = vld [vmem:[#allocation5 + $0x338] sm:$0xff]
    %v195 = vld [vmem:[#allocation5 + $0x340] sm:$0xff]
    %v196 = vld [vmem:[#allocation5 + $0x348] sm:$0xff]
    %v197 = vld [vmem:[#allocation5 + $0x350] sm:$0xff]
    %v198 = vld [vmem:[#allocation5 + $0x358] sm:$0xff]
    %v199 = vld [vmem:[#allocation5 + $0x360] sm:$0xff]
    %v200 = vld [vmem:[#allocation5 + $0x368] sm:$0xff]
    %v201 = vld [vmem:[#allocation5 + $0x370] sm:$0xff]
    %v202 = vld [vmem:[#allocation5 + $0x378] sm:$0xff]
    %v203 = vld [vmem:[#allocation5 + $0x380] sm:$0xff]
    %v204 = vld [vmem:[#allocation5 + $0x388] sm:$0xff]
    %v205 = vld [vmem:[#allocation5 + $0x390] sm:$0xff]
    %v206 = vld [vmem:[#allocation5 + $0x398] sm:$0xff]
    %v207 = vld [vmem:[#allocation5 + $0x3a0] sm:$0xff]
    %v208 = vld [vmem:[#allocation5 + $0x3a8] sm:$0xff]
    %v209 = vld [vmem:[#allocation5 + $0x3b0] sm:$0xff]
    %v210 = vld [vmem:[#allocation5 + $0x3b8] sm:$0xff]
    %v211 = vld [vmem:[#allocation5 + $0x3c0] sm:$0xff]
    %v212 = vld [vmem:[#allocation5 + $0x3c8] sm:$0xff]
    %v213 = vld [vmem:[#allocation5 + $0x3d0] sm:$0xff]
    %v214 = vld [vmem:[#allocation5 + $0x3d8] sm:$0xff]
    %v215 = vld [vmem:[#allocation5 + $0x3e0] sm:$0xff]
    %v216 = vld [vmem:[#allocation5 + $0x3e8] sm:$0xff]
    %v217 = vld [vmem:[#allocation5 + $0x3f0] sm:$0xff]
    %v218 = vld [vmem:[#allocation5 + $0x3f8] sm:$0xff]
    %v219 = vld [vmem:[#allocation5 + $0x400] sm:$0xff]
    %v220 = vld [vmem:[#allocation5 + $0x408] sm:$0xff]
    %v221 = vld [vmem:[#allocation5 + $0x410] sm:$0xff]
    %v222 = vld [vmem:[#allocation5 + $0x418] sm:$0xff]
    %v223 = vld [vmem:[#allocation5 + $0x420] sm:$0xff]
    %v224 = vld [vmem:[#allocation5 + $0x428] sm:$0xff]
    %v225 = vld [vmem:[#allocation5 + $0x430] sm:$0xff]
    %v226 = vld [vmem:[#allocation5 + $0x438] sm:$0xff]
    %v227 = vld [vmem:[#allocation5 + $0x440] sm:$0xff]
    %v228 = vld [vmem:[#allocation5 + $0x448] sm:$0xff]
    %v229 = vld [vmem:[#allocation5 + $0x450] sm:$0xff]
    %v230 = vld [vmem:[#allocation5 + $0x458] sm:$0xff]
    %v231 = vld [vmem:[#allocation5 + $0x460] sm:$0xff]
    %v232 = vld [vmem:[#allocation5 + $0x468] sm:$0xff]
    %v233 = vld [vmem:[#allocation5 + $0x470] sm:$0xff]
    %v234 = vld [vmem:[#allocation5 + $0x478] sm:$0xff]
    %v235 = vld [vmem:[#allocation5 + $0x480] sm:$0xff]
    %v236 = vld [vmem:[#allocation5 + $0x488] sm:$0xff]
    %v237 = vld [vmem:[#allocation5 + $0x490] sm:$0xff]
    %v238 = vld [vmem:[#allocation5 + $0x498] sm:$0xff]
    %v239 = vld [vmem:[#allocation5 + $0x4a0] sm:$0xff]
    %v240 = vld [vmem:[#allocation5 + $0x4a8] sm:$0xff]
    %v241 = vld [vmem:[#allocation5 + $0x4b0] sm:$0xff]
    %v242 = vld [vmem:[#allocation5 + $0x4b8] sm:$0xff]
    %v243 = vld [vmem:[#allocation5 + $0x4c0] sm:$0xff]
    %v244 = vld [vmem:[#allocation5 + $0x4c8] sm:$0xff]
    %v245 = vld [vmem:[#allocation5 + $0x4d0] sm:$0xff]
    %v246 = vld [vmem:[#allocation5 + $0x4d8] sm:$0xff]
    %v247 = vld [vmem:[#allocation5 + $0x4e0] sm:$0xff]
    %v248 = vld [vmem:[#allocation5 + $0x4e8] sm:$0xff]
    %v249 = vld [vmem:[#allocation5 + $0x4f0] sm:$0xff]
    %v250 = vld [vmem:[#allocation5 + $0x4f8] sm:$0xff]
    %v251 = vld [vmem:[%s3] sm:$0x1]
    %v252 = vperm.slane %v251, 0
    %253 = vmatpush.msra.mxu0 %v106
    %254 = vmatpush.msra.mxu0 %v105
    %255 = vmatpush.msra.mxu0 %v104
    %256 = vmatpush.msra.mxu0 %v103
    %257 = vmatpush.msra.mxu0 %v102
    %258 = vmatpush.msra.mxu0 %v101
    %259 = vmatpush.msra.mxu0 %v100
    %260 = vmatpush.msra.mxu0 %v99
    %261 = vmatpush.msra.mxu0 %v98
    %262 = vmatpush.msra.mxu0 %v97
    %263 = vmatpush.msra.mxu0 %v96
    %264 = vmatpush.msra.mxu0 %v95
    %265 = vmatpush.msra.mxu0 %v94
    %266 = vmatpush.msra.mxu0 %v93
    %267 = vmatpush.msra.mxu0 %v92
    %268 = vmatpush.msra.mxu0 %v91
    %269 = vmatmul.f32.gmra.mxu0 %v71
    %v270 = vpop.f32.mrf.mxu0
    %v271 = vadd.f32 %v252, %v270
    %272 = vmatmul.f32.gmra.mxu0 %v81
    %v273 = vpop.f32.mrf.mxu0
    %v274 = vadd.f32 %v252, %v273
    %275 = vdwg.mxu0
    %276 = vmatpush.msra.mxu0 %v122
    %277 = vmatpush.msra.mxu0 %v121
    %278 = vmatpush.msra.mxu0 %v120
    %279 = vmatpush.msra.mxu0 %v119
    %280 = vmatpush.msra.mxu0 %v118
    %281 = vmatpush.msra.mxu0 %v117
    %282 = vmatpush.msra.mxu0 %v116
    %283 = vmatpush.msra.mxu0 %v115
    %284 = vmatpush.msra.mxu0 %v114
    %285 = vmatpush.msra.mxu0 %v113
    %286 = vmatpush.msra.mxu0 %v112
    %287 = vmatpush.msra.mxu0 %v111
    %288 = vmatpush.msra.mxu0 %v110
    %289 = vmatpush.msra.mxu0 %v109
    %290 = vmatpush.msra.mxu0 %v108
    %291 = vmatpush.msra.mxu0 %v107
    %292 = vmatmul.f32.gmra.mxu0 %v72
    %v293 = vpop.f32.mrf.mxu0
    %v294 = vadd.f32 %v271, %v293
    %295 = vmatmul.f32.gmra.mxu0 %v82
    %v296 = vpop.f32.mrf.mxu0
    %v297 = vadd.f32 %v274, %v296
    %298 = vdwg.mxu0
    %299 = vmatpush.msra.mxu0 %v138
    %300 = vmatpush.msra.mxu0 %v137
    %301 = vmatpush.msra.mxu0 %v136
    %302 = vmatpush.msra.mxu0 %v135
    %303 = vmatpush.msra.mxu0 %v134
    %304 = vmatpush.msra.mxu0 %v133
    %305 = vmatpush.msra.mxu0 %v132
    %306 = vmatpush.msra.mxu0 %v131
    %307 = vmatpush.msra.mxu0 %v130
    %308 = vmatpush.msra.mxu0 %v129
    %309 = vmatpush.msra.mxu0 %v128
    %310 = vmatpush.msra.mxu0 %v127
    %311 = vmatpush.msra.mxu0 %v126
    %312 = vmatpush.msra.mxu0 %v125
    %313 = vmatpush.msra.mxu0 %v124
    %314 = vmatpush.msra.mxu0 %v123
    %315 = vmatmul.f32.gmra.mxu0 %v73
    %v316 = vpop.f32.mrf.mxu0
    %v317 = vadd.f32 %v294, %v316
    %318 = vmatmul.f32.gmra.mxu0 %v83
    %v319 = vpop.f32.mrf.mxu0
    %v320 = vadd.f32 %v297, %v319
    %321 = vdwg.mxu0
    %322 = vmatpush.msra.mxu0 %v154
    %323 = vmatpush.msra.mxu0 %v153
    %324 = vmatpush.msra.mxu0 %v152
    %325 = vmatpush.msra.mxu0 %v151
    %326 = vmatpush.msra.mxu0 %v150
    %327 = vmatpush.msra.mxu0 %v149
    %328 = vmatpush.msra.mxu0 %v148
    %329 = vmatpush.msra.mxu0 %v147
    %330 = vmatpush.msra.mxu0 %v146
    %331 = vmatpush.msra.mxu0 %v145
    %332 = vmatpush.msra.mxu0 %v144
    %333 = vmatpush.msra.mxu0 %v143
    %334 = vmatpush.msra.mxu0 %v142
    %335 = vmatpush.msra.mxu0 %v141
    %336 = vmatpush.msra.mxu0 %v140
    %337 = vmatpush.msra.mxu0 %v139
    %338 = vmatmul.f32.gmra.mxu0 %v74
    %v339 = vpop.f32.mrf.mxu0
    %v340 = vadd.f32 %v317, %v339
    %341 = vmatmul.f32.gmra.mxu0 %v84
    %v342 = vpop.f32.mrf.mxu0
    %v343 = vadd.f32 %v320, %v342
    %344 = vdwg.mxu0
    %345 = vmatpush.msra.mxu0 %v170
    %346 = vmatpush.msra.mxu0 %v169
    %347 = vmatpush.msra.mxu0 %v168
    %348 = vmatpush.msra.mxu0 %v167
    %349 = vmatpush.msra.mxu0 %v166
    %350 = vmatpush.msra.mxu0 %v165
    %351 = vmatpush.msra.mxu0 %v164
    %352 = vmatpush.msra.mxu0 %v163
    %353 = vmatpush.msra.mxu0 %v162
    %354 = vmatpush.msra.mxu0 %v161
    %355 = vmatpush.msra.mxu0 %v160
    %356 = vmatpush.msra.mxu0 %v159
    %357 = vmatpush.msra.mxu0 %v158
    %358 = vmatpush.msra.mxu0 %v157
    %359 = vmatpush.msra.mxu0 %v156
    %360 = vmatpush.msra.mxu0 %v155
    %361 = vmatmul.f32.gmra.mxu0 %v75
    %v362 = vpop.f32.mrf.mxu0
    %v363 = vadd.f32 %v340, %v362
    %364 = vmatmul.f32.gmra.mxu0 %v85
    %v365 = vpop.f32.mrf.mxu0
    %v366 = vadd.f32 %v343, %v365
    %367 = vdwg.mxu0
    %368 = vmatpush.msra.mxu0 %v186
    %369 = vmatpush.msra.mxu0 %v185
    %370 = vmatpush.msra.mxu0 %v184
    %371 = vmatpush.msra.mxu0 %v183
    %372 = vmatpush.msra.mxu0 %v182
    %373 = vmatpush.msra.mxu0 %v181
    %374 = vmatpush.msra.mxu0 %v180
    %375 = vmatpush.msra.mxu0 %v179
    %376 = vmatpush.msra.mxu0 %v178
    %377 = vmatpush.msra.mxu0 %v177
    %378 = vmatpush.msra.mxu0 %v176
    %379 = vmatpush.msra.mxu0 %v175
    %380 = vmatpush.msra.mxu0 %v174
    %381 = vmatpush.msra.mxu0 %v173
    %382 = vmatpush.msra.mxu0 %v172
    %383 = vmatpush.msra.mxu0 %v171
    %384 = vmatmul.f32.gmra.mxu0 %v76
    %v385 = vpop.f32.mrf.mxu0
    %v386 = vadd.f32 %v363, %v385
    %387 = vmatmul.f32.gmra.mxu0 %v86
    %v388 = vpop.f32.mrf.mxu0
    %v389 = vadd.f32 %v366, %v388
    %390 = vdwg.mxu0
    %391 = vmatpush.msra.mxu0 %v202
    %392 = vmatpush.msra.mxu0 %v201
    %393 = vmatpush.msra.mxu0 %v200
    %394 = vmatpush.msra.mxu0 %v199
    %395 = vmatpush.msra.mxu0 %v198
    %396 = vmatpush.msra.mxu0 %v197
    %397 = vmatpush.msra.mxu0 %v196
    %398 = vmatpush.msra.mxu0 %v195
    %399 = vmatpush.msra.mxu0 %v194
    %400 = vmatpush.msra.mxu0 %v193
    %401 = vmatpush.msra.mxu0 %v192
    %402 = vmatpush.msra.mxu0 %v191
    %403 = vmatpush.msra.mxu0 %v190
    %404 = vmatpush.msra.mxu0 %v189
    %405 = vmatpush.msra.mxu0 %v188
    %406 = vmatpush.msra.mxu0 %v187
    %407 = vmatmul.f32.gmra.mxu0 %v77
    %v408 = vpop.f32.mrf.mxu0
    %v409 = vadd.f32 %v386, %v408
    %410 = vmatmul.f32.gmra.mxu0 %v87
    %v411 = vpop.f32.mrf.mxu0
    %v412 = vadd.f32 %v389, %v411
    %413 = vdwg.mxu0
    %414 = vmatpush.msra.mxu0 %v218
    %415 = vmatpush.msra.mxu0 %v217
    %416 = vmatpush.msra.mxu0 %v216
    %417 = vmatpush.msra.mxu0 %v215
    %418 = vmatpush.msra.mxu0 %v214
    %419 = vmatpush.msra.mxu0 %v213
    %420 = vmatpush.msra.mxu0 %v212
    %421 = vmatpush.msra.mxu0 %v211
    %422 = vmatpush.msra.mxu0 %v210
    %423 = vmatpush.msra.mxu0 %v209
    %424 = vmatpush.msra.mxu0 %v208
    %425 = vmatpush.msra.mxu0 %v207
    %426 = vmatpush.msra.mxu0 %v206
    %427 = vmatpush.msra.mxu0 %v205
    %428 = vmatpush.msra.mxu0 %v204
    %429 = vmatpush.msra.mxu0 %v203
    %430 = vmatmul.f32.gmra.mxu0 %v78
    %v431 = vpop.f32.mrf.mxu0
    %v432 = vadd.f32 %v409, %v431
    %433 = vmatmul.f32.gmra.mxu0 %v88
    %v434 = vpop.f32.mrf.mxu0
    %v435 = vadd.f32 %v412, %v434
    %436 = vdwg.mxu0
    %437 = vmatpush.msra.mxu0 %v234
    %438 = vmatpush.msra.mxu0 %v233
    %439 = vmatpush.msra.mxu0 %v232
    %440 = vmatpush.msra.mxu0 %v231
    %441 = vmatpush.msra.mxu0 %v230
    %442 = vmatpush.msra.mxu0 %v229
    %443 = vmatpush.msra.mxu0 %v228
    %444 = vmatpush.msra.mxu0 %v227
    %445 = vmatpush.msra.mxu0 %v226
    %446 = vmatpush.msra.mxu0 %v225
    %447 = vmatpush.msra.mxu0 %v224
    %448 = vmatpush.msra.mxu0 %v223
    %449 = vmatpush.msra.mxu0 %v222
    %450 = vmatpush.msra.mxu0 %v221
    %451 = vmatpush.msra.mxu0 %v220
    %452 = vmatpush.msra.mxu0 %v219
    %453 = vmatmul.f32.gmra.mxu0 %v79
    %v454 = vpop.f32.mrf.mxu0
    %v455 = vadd.f32 %v432, %v454
    %456 = vmatmul.f32.gmra.mxu0 %v89
    %v457 = vpop.f32.mrf.mxu0
    %v458 = vadd.f32 %v435, %v457
    %459 = vdwg.mxu0
    %460 = vmatpush.msra.mxu0 %v250
    %461 = vmatpush.msra.mxu0 %v249
    %462 = vmatpush.msra.mxu0 %v248
    %463 = vmatpush.msra.mxu0 %v247
    %464 = vmatpush.msra.mxu0 %v246
    %465 = vmatpush.msra.mxu0 %v245
    %466 = vmatpush.msra.mxu0 %v244
    %467 = vmatpush.msra.mxu0 %v243
    %468 = vmatpush.msra.mxu0 %v242
    %469 = vmatpush.msra.mxu0 %v241
    %470 = vmatpush.msra.mxu0 %v240
    %471 = vmatpush.msra.mxu0 %v239
    %472 = vmatpush.msra.mxu0 %v238
    %473 = vmatpush.msra.mxu0 %v237
    %474 = vmatpush.msra.mxu0 %v236
    %475 = vmatpush.msra.mxu0 %v235
    %476 = vmatmul.f32.gmra.mxu0 %v80
    %v477 = vpop.f32.mrf.mxu0
    %v478 = vadd.f32 %v455, %v477
    %479 = vmatmul.f32.gmra.mxu0 %v90
    %v480 = vpop.f32.mrf.mxu0
    %v481 = vadd.f32 %v458, %v480
    %482 = vdwg.mxu0
    %v483 = vld [vmem:[#allocation7] sm:$0xff]
    %v484 = vld [vmem:[#allocation7 + $0x8] sm:$0xff]
    %v485 = vld [vmem:[#allocation7 + $0x10] sm:$0xff]
    %v486 = vld [vmem:[#allocation7 + $0x18] sm:$0xff]
    %v487 = vld [vmem:[#allocation7 + $0x20] sm:$0xff]
    %v488 = vld [vmem:[#allocation7 + $0x28] sm:$0xff]
    %v489 = vld [vmem:[#allocation7 + $0x30] sm:$0xff]
    %v490 = vld [vmem:[#allocation7 + $0x38] sm:$0xff]
    %v491 = vld [vmem:[#allocation7 + $0x40] sm:$0xff]
    %v492 = vld [vmem:[#allocation7 + $0x48] sm:$0xff]
    %v493 = vld [vmem:[#allocation7 + $0x50] sm:$0xff]
    %v494 = vld [vmem:[#allocation7 + $0x58] sm:$0xff]
    %v495 = vld [vmem:[#allocation7 + $0x60] sm:$0xff]
    %v496 = vld [vmem:[#allocation7 + $0x68] sm:$0xff]
    %v497 = vld [vmem:[#allocation7 + $0x70] sm:$0xff]
    %v498 = vld [vmem:[#allocation7 + $0x78] sm:$0xff]
    %v499 = vld [vmem:[#allocation7 + $0x80] sm:$0xff]
    %v500 = vld [vmem:[#allocation7 + $0x88] sm:$0xff]
    %v501 = vld [vmem:[#allocation7 + $0x90] sm:$0xff]
    %v502 = vld [vmem:[#allocation7 + $0x98] sm:$0xff]
    %v503 = vld [vmem:[%s3 + $0x1] sm:$0x1]
    %v504 = vperm.slane %v503, 0
    %v505 = vld [vmem:[%s3 + $0x2] sm:$0x1]
    %v506 = vperm.slane %v505, 0
    %v508 = vrot.slane %v481, 7
    %vm510 = vcmask 1040384
    %v511 = vsel %vm510, %v478, %v508
    %vm512 = vcmask 261120
    %v514 = vsel %vm512, 0.0, 0
    %516 = vmatpush.msra.mxu0 0.0
    %517 = vmatpush.msra.mxu0 0.0
    %518 = vmatpush.msra.mxu0 0.0
    %519 = vmatpush.msra.mxu0 0.0
    %520 = vmatpush.msra.mxu0 0.0
    %521 = vmatpush.msra.mxu0 0.0
    %522 = vmatpush.msra.mxu0 0.0
    %523 = vmatpush.msra.mxu0 0.0
    %524 = vmatpush.msra.mxu0 0.0
    %525 = vmatpush.msra.mxu0 0.0
    %526 = vmatpush.msra.mxu0 0.0
    %527 = vmatpush.msra.mxu0 0.0
    %528 = vmatpush.msra.mxu0 %v486
    %529 = vmatpush.msra.mxu0 %v485
    %530 = vmatpush.msra.mxu0 %v484
    %531 = vmatpush.msra.mxu0 %v483
    %532 = vmatmul.f32.gmra.mxu0 %v514
    %v533 = vpop.f32.mrf.mxu0
    %v534 = vadd.f32 0.0, %v533
    %535 = vdwg.mxu0
    %v536 = vadd.f32 %v511, %v534
    %v537 = vxor.u32 %v536, 2147483648
    %v538 = vmul.f32 %v537, 1.442695
    %v539 = vpow.pop %v538
    %v540 = vadd.f32 %v539, 1.0
    %v541 = vrcp.pop %v540
    %v542 = vmul.f32 %v540, %v541
    %v543 = vsub.f32 1.0, %v542
    %v544 = vmul.f32 %v541, %v543
    %v545 = vadd.f32 %v541, %v544
    %vm546 = vweird.f32 %v540
    %vm547 = vweird.f32 %v541
    %vm548 = vmor %vm546, %vm547
    %v549 = vsel %vm548, %v541, %v545
    %v550 = vand.u32 2147483647, %v540
    %vm551 = vcmp.eq.f32.partialorder %v550, 8.507059e+37
    %v552 = vand.u32 %v540, 2147483648
    %v553 = vor.u32 1.1754944e-38, %v552
    %v554 = vsel %vm551, %v553, %v549
    %v555 = vmul.f32 1.0, %v554
    %v556 = vtanh.pop %v536
    %v557 = vmul.f32 %v555, 0.0
    %559 = vrot.lane.b32.xlu0 %v556, 64
    %v560 = vpop.permute.xlu0 %559
    %v562 = vmul.f32 %v555, %v560
    %564 = vrot.lane.b32.xlu0 %v562, 32
    %v565 = vpop.permute.xlu0 %564
    %v567 = vadd.f32 %v557, %v565
    %v568 = vtanh.pop %v567
    %570 = vrot.lane.b32.xlu0 %v568, 64
    %v571 = vpop.permute.xlu0 %570
    %v573 = vmul.f32 %v555, %v571
    %575 = vrot.lane.b32.xlu0 %v573, 32
    %v576 = vpop.permute.xlu0 %575
    %v578 = vsel %vm512, %v576, 0.0
    %vm579 = vcmask 523264
    %v581 = vsel %vm579, %v578, 0
    %583 = vmatpush.msra.mxu0 0.0
    %584 = vmatpush.msra.mxu0 0.0
    %585 = vmatpush.msra.mxu0 0.0
    %586 = vmatpush.msra.mxu0 0.0
    %587 = vmatpush.msra.mxu0 0.0
    %588 = vmatpush.msra.mxu0 0.0
    %589 = vmatpush.msra.mxu0 0.0
    %590 = vmatpush.msra.mxu0 0.0
    %591 = vmatpush.msra.mxu0 %v494
    %592 = vmatpush.msra.mxu0 %v493
    %593 = vmatpush.msra.mxu0 %v492
    %594 = vmatpush.msra.mxu0 %v491
    %595 = vmatpush.msra.mxu0 %v490
    %596 = vmatpush.msra.mxu0 %v489
    %597 = vmatpush.msra.mxu0 %v488
    %598 = vmatpush.msra.mxu0 %v487
    %599 = vmatmul.f32.gmra.mxu0 %v581
    %v600 = vpop.f32.mrf.mxu0
    %v601 = vadd.f32 %v504, %v600
    %602 = vdwg.mxu0
    %v603 = vxor.u32 %v601, 2147483648
    %v604 = vmul.f32 %v603, 1.442695
    %v605 = vpow.pop %v604
    %v606 = vadd.f32 %v605, 1.0
    %v607 = vrcp.pop %v606
    %v608 = vmul.f32 %v606, %v607
    %v609 = vsub.f32 1.0, %v608
    %v610 = vmul.f32 %v607, %v609
    %v611 = vadd.f32 %v607, %v610
    %vm612 = vweird.f32 %v606
    %vm613 = vweird.f32 %v607
    %vm614 = vmor %vm612, %vm613
    %v615 = vsel %vm614, %v607, %v611
    %v616 = vand.u32 2147483647, %v606
    %vm617 = vcmp.eq.f32.partialorder %v616, 8.507059e+37
    %v618 = vand.u32 %v606, 2147483648
    %v619 = vor.u32 1.1754944e-38, %v618
    %v620 = vsel %vm617, %v619, %v615
    %v621 = vmul.f32 1.0, %v620
    %v622 = vtanh.pop %v601
    %v623 = vmul.f32 %v621, 0.0
    %625 = vrot.lane.b32.xlu0 %v622, 64
    %v626 = vpop.permute.xlu0 %625
    %v628 = vmul.f32 %v621, %v626
    %630 = vrot.lane.b32.xlu0 %v628, 32
    %v631 = vpop.permute.xlu0 %630
    %v633 = vadd.f32 %v623, %v631
    %v634 = vtanh.pop %v633
    %636 = vrot.lane.b32.xlu0 %v634, 64
    %v637 = vpop.permute.xlu0 %636
    %v639 = vmul.f32 %v621, %v637
    %641 = vrot.lane.b32.xlu0 %v639, 32
    %v642 = vpop.permute.xlu0 %641
    %v644 = vsel %vm512, %v642, 0.0
    %v646 = vsel %vm579, %v644, 0
    %648 = vmatpush.msra.mxu0 0.0
    %649 = vmatpush.msra.mxu0 0.0
    %650 = vmatpush.msra.mxu0 0.0
    %651 = vmatpush.msra.mxu0 0.0
    %652 = vmatpush.msra.mxu0 0.0
    %653 = vmatpush.msra.mxu0 0.0
    %654 = vmatpush.msra.mxu0 0.0
    %655 = vmatpush.msra.mxu0 0.0
    %656 = vmatpush.msra.mxu0 %v502
    %657 = vmatpush.msra.mxu0 %v501
    %658 = vmatpush.msra.mxu0 %v500
    %659 = vmatpush.msra.mxu0 %v499
    %660 = vmatpush.msra.mxu0 %v498
    %661 = vmatpush.msra.mxu0 %v497
    %662 = vmatpush.msra.mxu0 %v496
    %663 = vmatpush.msra.mxu0 %v495
    %664 = vmatmul.f32.gmra.mxu0 %v646
    %v665 = vpop.f32.mrf.mxu0
    %v666 = vadd.f32 %v506, %v665
    %667 = vdwg.mxu0
    %v668 = vxor.u32 %v666, 2147483648
    %v669 = vmul.f32 %v668, 1.442695
    %v670 = vpow.pop %v669
    %v671 = vadd.f32 %v670, 1.0
    %v672 = vrcp.pop %v671
    %v673 = vmul.f32 %v671, %v672
    %v674 = vsub.f32 1.0, %v673
    %v675 = vmul.f32 %v672, %v674
    %v676 = vadd.f32 %v672, %v675
    %vm677 = vweird.f32 %v671
    %vm678 = vweird.f32 %v672
    %vm679 = vmor %vm677, %vm678
    %v680 = vsel %vm679, %v672, %v676
    %v681 = vand.u32 2147483647, %v671
    %vm682 = vcmp.eq.f32.partialorder %v681, 8.507059e+37
    %v683 = vand.u32 %v671, 2147483648
    %v684 = vor.u32 1.1754944e-38, %v683
    %v685 = vsel %vm682, %v684, %v680
    %v686 = vmul.f32 1.0, %v685
    %v687 = vtanh.pop %v666
    %v688 = vmul.f32 %v686, 0.0
    %690 = vrot.lane.b32.xlu0 %v687, 64
    %v691 = vpop.permute.xlu0 %690
    %v693 = vmul.f32 %v686, %v691
    %695 = vrot.lane.b32.xlu0 %v693, 32
    %v696 = vpop.permute.xlu0 %695
    %v698 = vadd.f32 %v688, %v696
    %v699 = vtanh.pop %v698
    %701 = vrot.lane.b32.xlu0 %v699, 64
    %v702 = vpop.permute.xlu0 %701
    %v704 = vmul.f32 %v686, %v702
    %v706 = vrot.slane %v478, 1
    %v708 = vsel %vm510, %v706, %v481
    %v709 = vsel %vm512, %v576, 0
    %711 = vmatpush.msra.mxu0 0.0
    %712 = vmatpush.msra.mxu0 0.0
    %713 = vmatpush.msra.mxu0 0.0
    %714 = vmatpush.msra.mxu0 0.0
    %715 = vmatpush.msra.mxu0 0.0
    %716 = vmatpush.msra.mxu0 0.0
    %717 = vmatpush.msra.mxu0 0.0
    %718 = vmatpush.msra.mxu0 0.0
    %719 = vmatpush.msra.mxu0 0.0
    %720 = vmatpush.msra.mxu0 0.0
    %721 = vmatpush.msra.mxu0 0.0
    %722 = vmatpush.msra.mxu0 0.0
    %723 = vmatpush.msra.mxu0 %v486
    %724 = vmatpush.msra.mxu0 %v485
    %725 = vmatpush.msra.mxu0 %v484
    %726 = vmatpush.msra.mxu0 %v483
    %727 = vmatmul.f32.gmra.mxu0 %v709
    %v728 = vpop.f32.mrf.mxu0
    %v729 = vadd.f32 0.0, %v728
    %730 = vdwg.mxu0
    %v731 = vadd.f32 %v708, %v729
    %v732 = vxor.u32 %v731, 2147483648
    %v733 = vmul.f32 %v732, 1.442695
    %v734 = vpow.pop %v733
    %v735 = vadd.f32 %v734, 1.0
    %v736 = vrcp.pop %v735
    %v737 = vmul.f32 %v735, %v736
    %v738 = vsub.f32 1.0, %v737
    %v739 = vmul.f32 %v736, %v738
    %v740 = vadd.f32 %v736, %v739
    %vm741 = vweird.f32 %v735
    %vm742 = vweird.f32 %v736
    %vm743 = vmor %vm741, %vm742
    %v744 = vsel %vm743, %v736, %v740
    %v745 = vand.u32 2147483647, %v735
    %vm746 = vcmp.eq.f32.partialorder %v745, 8.507059e+37
    %v747 = vand.u32 %v735, 2147483648
    %v748 = vor.u32 1.1754944e-38, %v747
    %v749 = vsel %vm746, %v748, %v744
    %v750 = vmul.f32 1.0, %v749
    %v751 = vtanh.pop %v731
    %v752 = vmul.f32 %v750, %v567
    %754 = vrot.lane.b32.xlu0 %v751, 64
    %v755 = vpop.permute.xlu0 %754
    %v757 = vmul.f32 %v750, %v755
    %759 = vrot.lane.b32.xlu0 %v757, 32
    %v760 = vpop.permute.xlu0 %759
    %v762 = vadd.f32 %v752, %v760
    %v763 = vtanh.pop %v762
    %765 = vrot.lane.b32.xlu0 %v763, 64
    %v766 = vpop.permute.xlu0 %765
    %v768 = vmul.f32 %v750, %v766
    %770 = vrot.lane.b32.xlu0 %v768, 32
    %v771 = vpop.permute.xlu0 %770
    %773 = vrot.lane.b32.xlu0 %v639, 64
    %v774 = vpop.permute.xlu0 %773
    %v776 = vsel %vm512, %v771, %v774
    %v778 = vsel %vm579, %v776, 0
    %780 = vmatpush.msra.mxu0 0.0
    %781 = vmatpush.msra.mxu0 0.0
    %782 = vmatpush.msra.mxu0 0.0
    %783 = vmatpush.msra.mxu0 0.0
    %784 = vmatpush.msra.mxu0 0.0
    %785 = vmatpush.msra.mxu0 0.0
    %786 = vmatpush.msra.mxu0 0.0
    %787 = vmatpush.msra.mxu0 0.0
    %788 = vmatpush.msra.mxu0 %v494
    %789 = vmatpush.msra.mxu0 %v493
    %790 = vmatpush.msra.mxu0 %v492
    %791 = vmatpush.msra.mxu0 %v491
    %792 = vmatpush.msra.mxu0 %v490
    %793 = vmatpush.msra.mxu0 %v489
    %794 = vmatpush.msra.mxu0 %v488
    %795 = vmatpush.msra.mxu0 %v487
    %796 = vmatmul.f32.gmra.mxu0 %v778
    %v797 = vpop.f32.mrf.mxu0
    %v798 = vadd.f32 %v504, %v797
    %799 = vdwg.mxu0
    %v800 = vxor.u32 %v798, 2147483648
    %v801 = vmul.f32 %v800, 1.442695
    %v802 = vpow.pop %v801
    %v803 = vadd.f32 %v802, 1.0
    %v804 = vrcp.pop %v803
    %v805 = vmul.f32 %v803, %v804
    %v806 = vsub.f32 1.0, %v805
    %v807 = vmul.f32 %v804, %v806
    %v808 = vadd.f32 %v804, %v807
    %vm809 = vweird.f32 %v803
    %vm810 = vweird.f32 %v804
    %vm811 = vmor %vm809, %vm810
    %v812 = vsel %vm811, %v804, %v808
    %v813 = vand.u32 2147483647, %v803
    %vm814 = vcmp.eq.f32.partialorder %v813, 8.507059e+37
    %v815 = vand.u32 %v803, 2147483648
    %v816 = vor.u32 1.1754944e-38, %v815
    %v817 = vsel %vm814, %v816, %v812
    %v818 = vmul.f32 1.0, %v817
    %v819 = vtanh.pop %v798
    %v820 = vmul.f32 %v818, %v633
    %822 = vrot.lane.b32.xlu0 %v819, 64
    %v823 = vpop.permute.xlu0 %822
    %v825 = vmul.f32 %v818, %v823
    %827 = vrot.lane.b32.xlu0 %v825, 32
    %v828 = vpop.permute.xlu0 %827
    %v830 = vadd.f32 %v820, %v828
    %v831 = vtanh.pop %v830
    %833 = vrot.lane.b32.xlu0 %v831, 64
    %v834 = vpop.permute.xlu0 %833
    %v836 = vmul.f32 %v818, %v834
    %838 = vrot.lane.b32.xlu0 %v836, 32
    %v839 = vpop.permute.xlu0 %838
    %842 = vrot.lane.b32.xlu0 %v704, 64
    %v843 = vpop.permute.xlu0 %842
    %v845 = vsel %vm512, %v839, %v843
    %v847 = vsel %vm579, %v845, 0
    %849 = vmatpush.msra.mxu0 0.0
    %850 = vmatpush.msra.mxu0 0.0
    %851 = vmatpush.msra.mxu0 0.0
    %852 = vmatpush.msra.mxu0 0.0
    %853 = vmatpush.msra.mxu0 0.0
    %854 = vmatpush.msra.mxu0 0.0
    %855 = vmatpush.msra.mxu0 0.0
    %856 = vmatpush.msra.mxu0 0.0
    %857 = vmatpush.msra.mxu0 %v502
    %858 = vmatpush.msra.mxu0 %v501
    %859 = vmatpush.msra.mxu0 %v500
    %860 = vmatpush.msra.mxu0 %v499
    %861 = vmatpush.msra.mxu0 %v498
    %862 = vmatpush.msra.mxu0 %v497
    %863 = vmatpush.msra.mxu0 %v496
    %864 = vmatpush.msra.mxu0 %v495
    %865 = vmatmul.f32.gmra.mxu0 %v847
    %v866 = vpop.f32.mrf.mxu0
    %v867 = vadd.f32 %v506, %v866
    %868 = vdwg.mxu0
    %v869 = vxor.u32 %v867, 2147483648
    %v870 = vmul.f32 %v869, 1.442695
    %v871 = vpow.pop %v870
    %v872 = vadd.f32 %v871, 1.0
    %v873 = vrcp.pop %v872
    %v874 = vmul.f32 %v872, %v873
    %v875 = vsub.f32 1.0, %v874
    %v876 = vmul.f32 %v873, %v875
    %v877 = vadd.f32 %v873, %v876
    %vm878 = vweird.f32 %v872
    %vm879 = vweird.f32 %v873
    %vm880 = vmor %vm878, %vm879
    %v881 = vsel %vm880, %v873, %v877
    %v882 = vand.u32 2147483647, %v872
    %vm883 = vcmp.eq.f32.partialorder %v882, 8.507059e+37
    %v884 = vand.u32 %v872, 2147483648
    %v885 = vor.u32 1.1754944e-38, %v884
    %v886 = vsel %vm883, %v885, %v881
    %v887 = vmul.f32 1.0, %v886
    %v888 = vtanh.pop %v867
    %v889 = vmul.f32 %v887, %v698
    %891 = vrot.lane.b32.xlu0 %v888, 64
    %v892 = vpop.permute.xlu0 %891
    %v894 = vmul.f32 %v887, %v892
    %896 = vrot.lane.b32.xlu0 %v894, 32
    %v897 = vpop.permute.xlu0 %896
    %v899 = vadd.f32 %v889, %v897
    %v900 = vtanh.pop %v899
    %902 = vrot.lane.b32.xlu0 %v900, 64
    %v903 = vpop.permute.xlu0 %902
    %v905 = vmul.f32 %v887, %v903
    %v906 = vrot.slane %v478, 2
    %v908 = vrot.slane %v481, 1
    %v910 = vsel %vm510, %v906, %v908
    %v911 = vsel %vm512, %v771, 0
    %913 = vmatpush.msra.mxu0 0.0
    %914 = vmatpush.msra.mxu0 0.0
    %915 = vmatpush.msra.mxu0 0.0
    %916 = vmatpush.msra.mxu0 0.0
    %917 = vmatpush.msra.mxu0 0.0
    %918 = vmatpush.msra.mxu0 0.0
    %919 = vmatpush.msra.mxu0 0.0
    %920 = vmatpush.msra.mxu0 0.0
    %921 = vmatpush.msra.mxu0 0.0
    %922 = vmatpush.msra.mxu0 0.0
    %923 = vmatpush.msra.mxu0 0.0
    %924 = vmatpush.msra.mxu0 0.0
    %925 = vmatpush.msra.mxu0 %v486
    %926 = vmatpush.msra.mxu0 %v485
    %927 = vmatpush.msra.mxu0 %v484
    %928 = vmatpush.msra.mxu0 %v483
    %929 = vmatmul.f32.gmra.mxu0 %v911
    %v930 = vpop.f32.mrf.mxu0
    %v931 = vadd.f32 0.0, %v930
    %932 = vdwg.mxu0
    %v933 = vadd.f32 %v910, %v931
    %v934 = vxor.u32 %v933, 2147483648
    %v935 = vmul.f32 %v934, 1.442695
    %v936 = vpow.pop %v935
    %v937 = vadd.f32 %v936, 1.0
    %v938 = vrcp.pop %v937
    %v939 = vmul.f32 %v937, %v938
    %v940 = vsub.f32 1.0, %v939
    %v941 = vmul.f32 %v938, %v940
    %v942 = vadd.f32 %v938, %v941
    %vm943 = vweird.f32 %v937
    %vm944 = vweird.f32 %v938
    %vm945 = vmor %vm943, %vm944
    %v946 = vsel %vm945, %v938, %v942
    %v947 = vand.u32 2147483647, %v937
    %vm948 = vcmp.eq.f32.partialorder %v947, 8.507059e+37
    %v949 = vand.u32 %v937, 2147483648
    %v950 = vor.u32 1.1754944e-38, %v949
    %v951 = vsel %vm948, %v950, %v946
    %v952 = vmul.f32 1.0, %v951
    %v953 = vtanh.pop %v933
    %v954 = vmul.f32 %v952, %v762
    %956 = vrot.lane.b32.xlu0 %v953, 64
    %v957 = vpop.permute.xlu0 %956
    %v959 = vmul.f32 %v952, %v957
    %961 = vrot.lane.b32.xlu0 %v959, 32
    %v962 = vpop.permute.xlu0 %961
    %v964 = vadd.f32 %v954, %v962
    %v965 = vtanh.pop %v964
    %967 = vrot.lane.b32.xlu0 %v965, 64
    %v968 = vpop.permute.xlu0 %967
    %v970 = vmul.f32 %v952, %v968
    %972 = vrot.lane.b32.xlu0 %v970, 32
    %v973 = vpop.permute.xlu0 %972
    %975 = vrot.lane.b32.xlu0 %v836, 64
    %v976 = vpop.permute.xlu0 %975
    %v978 = vsel %vm512, %v973, %v976
    %v980 = vsel %vm579, %v978, 0
    %982 = vmatpush.msra.mxu0 0.0
    %983 = vmatpush.msra.mxu0 0.0
    %984 = vmatpush.msra.mxu0 0.0
    %985 = vmatpush.msra.mxu0 0.0
    %986 = vmatpush.msra.mxu0 0.0
    %987 = vmatpush.msra.mxu0 0.0
    %988 = vmatpush.msra.mxu0 0.0
    %989 = vmatpush.msra.mxu0 0.0
    %990 = vmatpush.msra.mxu0 %v494
    %991 = vmatpush.msra.mxu0 %v493
    %992 = vmatpush.msra.mxu0 %v492
    %993 = vmatpush.msra.mxu0 %v491
    %994 = vmatpush.msra.mxu0 %v490
    %995 = vmatpush.msra.mxu0 %v489
    %996 = vmatpush.msra.mxu0 %v488
    %997 = vmatpush.msra.mxu0 %v487
    %998 = vmatmul.f32.gmra.mxu0 %v980
    %v999 = vpop.f32.mrf.mxu0
    %v1000 = vadd.f32 %v504, %v999
    %1001 = vdwg.mxu0
    %v1002 = vxor.u32 %v1000, 2147483648
    %v1003 = vmul.f32 %v1002, 1.442695
    %v1004 = vpow.pop %v1003
    %v1005 = vadd.f32 %v1004, 1.0
    %v1006 = vrcp.pop %v1005
    %v1007 = vmul.f32 %v1005, %v1006
    %v1008 = vsub.f32 1.0, %v1007
    %v1009 = vmul.f32 %v1006, %v1008
    %v1010 = vadd.f32 %v1006, %v1009
    %vm1011 = vweird.f32 %v1005
    %vm1012 = vweird.f32 %v1006
    %vm1013 = vmor %vm1011, %vm1012
    %v1014 = vsel %vm1013, %v1006, %v1010
    %v1015 = vand.u32 2147483647, %v1005
    %vm1016 = vcmp.eq.f32.partialorder %v1015, 8.507059e+37
    %v1017 = vand.u32 %v1005, 2147483648
    %v1018 = vor.u32 1.1754944e-38, %v1017
    %v1019 = vsel %vm1016, %v1018, %v1014
    %v1020 = vmul.f32 1.0, %v1019
    %v1021 = vtanh.pop %v1000
    %v1022 = vmul.f32 %v1020, %v830
    %1024 = vrot.lane.b32.xlu0 %v1021, 64
    %v1025 = vpop.permute.xlu0 %1024
    %v1027 = vmul.f32 %v1020, %v1025
    %1029 = vrot.lane.b32.xlu0 %v1027, 32
    %v1030 = vpop.permute.xlu0 %1029
    %v1032 = vadd.f32 %v1022, %v1030
    %v1033 = vtanh.pop %v1032
    %1035 = vrot.lane.b32.xlu0 %v1033, 64
    %v1036 = vpop.permute.xlu0 %1035
    %v1038 = vmul.f32 %v1020, %v1036
    %1040 = vrot.lane.b32.xlu0 %v1038, 32
    %v1041 = vpop.permute.xlu0 %1040
    %1044 = vrot.lane.b32.xlu0 %v905, 64
    %v1045 = vpop.permute.xlu0 %1044
    %v1047 = vsel %vm512, %v1041, %v1045
    %v1049 = vsel %vm579, %v1047, 0
    %1051 = vmatpush.msra.mxu0 0.0
    %1052 = vmatpush.msra.mxu0 0.0
    %1053 = vmatpush.msra.mxu0 0.0
    %1054 = vmatpush.msra.mxu0 0.0
    %1055 = vmatpush.msra.mxu0 0.0
    %1056 = vmatpush.msra.mxu0 0.0
    %1057 = vmatpush.msra.mxu0 0.0
    %1058 = vmatpush.msra.mxu0 0.0
    %1059 = vmatpush.msra.mxu0 %v502
    %1060 = vmatpush.msra.mxu0 %v501
    %1061 = vmatpush.msra.mxu0 %v500
    %1062 = vmatpush.msra.mxu0 %v499
    %1063 = vmatpush.msra.mxu0 %v498
    %1064 = vmatpush.msra.mxu0 %v497
    %1065 = vmatpush.msra.mxu0 %v496
    %1066 = vmatpush.msra.mxu0 %v495
    %1067 = vmatmul.f32.gmra.mxu0 %v1049
    %v1068 = vpop.f32.mrf.mxu0
    %v1069 = vadd.f32 %v506, %v1068
    %1070 = vdwg.mxu0
    %v1071 = vxor.u32 %v1069, 2147483648
    %v1072 = vmul.f32 %v1071, 1.442695
    %v1073 = vpow.pop %v1072
    %v1074 = vadd.f32 %v1073, 1.0
    %v1075 = vrcp.pop %v1074
    %v1076 = vmul.f32 %v1074, %v1075
    %v1077 = vsub.f32 1.0, %v1076
    %v1078 = vmul.f32 %v1075, %v1077
    %v1079 = vadd.f32 %v1075, %v1078
    %vm1080 = vweird.f32 %v1074
    %vm1081 = vweird.f32 %v1075
    %vm1082 = vmor %vm1080, %vm1081
    %v1083 = vsel %vm1082, %v1075, %v1079
    %v1084 = vand.u32 2147483647, %v1074
    %vm1085 = vcmp.eq.f32.partialorder %v1084, 8.507059e+37
    %v1086 = vand.u32 %v1074, 2147483648
    %v1087 = vor.u32 1.1754944e-38, %v1086
    %v1088 = vsel %vm1085, %v1087, %v1083
    %v1089 = vmul.f32 1.0, %v1088
    %v1090 = vtanh.pop %v1069
    %v1091 = vmul.f32 %v1089, %v899
    %1093 = vrot.lane.b32.xlu0 %v1090, 64
    %v1094 = vpop.permute.xlu0 %1093
    %v1096 = vmul.f32 %v1089, %v1094
    %1098 = vrot.lane.b32.xlu0 %v1096, 32
    %v1099 = vpop.permute.xlu0 %1098
    %v1101 = vadd.f32 %v1091, %v1099
    %v1102 = vtanh.pop %v1101
    %1104 = vrot.lane.b32.xlu0 %v1102, 64
    %v1105 = vpop.permute.xlu0 %1104
    %v1107 = vmul.f32 %v1089, %v1105
    %v1108 = vrot.slane %v478, 3
    %v1110 = vrot.slane %v481, 2
    %v1112 = vsel %vm510, %v1108, %v1110
    %v1113 = vsel %vm512, %v973, 0
    %1115 = vmatpush.msra.mxu0 0.0
    %1116 = vmatpush.msra.mxu0 0.0
    %1117 = vmatpush.msra.mxu0 0.0
    %1118 = vmatpush.msra.mxu0 0.0
    %1119 = vmatpush.msra.mxu0 0.0
    %1120 = vmatpush.msra.mxu0 0.0
    %1121 = vmatpush.msra.mxu0 0.0
    %1122 = vmatpush.msra.mxu0 0.0
    %1123 = vmatpush.msra.mxu0 0.0
    %1124 = vmatpush.msra.mxu0 0.0
    %1125 = vmatpush.msra.mxu0 0.0
    %1126 = vmatpush.msra.mxu0 0.0
    %1127 = vmatpush.msra.mxu0 %v486
    %1128 = vmatpush.msra.mxu0 %v485
    %1129 = vmatpush.msra.mxu0 %v484
    %1130 = vmatpush.msra.mxu0 %v483
    %1131 = vmatmul.f32.gmra.mxu0 %v1113
    %v1132 = vpop.f32.mrf.mxu0
    %v1133 = vadd.f32 0.0, %v1132
    %1134 = vdwg.mxu0
    %v1135 = vadd.f32 %v1112, %v1133
    %v1136 = vxor.u32 %v1135, 2147483648
    %v1137 = vmul.f32 %v1136, 1.442695
    %v1138 = vpow.pop %v1137
    %v1139 = vadd.f32 %v1138, 1.0
    %v1140 = vrcp.pop %v1139
    %v1141 = vmul.f32 %v1139, %v1140
    %v1142 = vsub.f32 1.0, %v1141
    %v1143 = vmul.f32 %v1140, %v1142
    %v1144 = vadd.f32 %v1140, %v1143
    %vm1145 = vweird.f32 %v1139
    %vm1146 = vweird.f32 %v1140
    %vm1147 = vmor %vm1145, %vm1146
    %v1148 = vsel %vm1147, %v1140, %v1144
    %v1149 = vand.u32 2147483647, %v1139
    %vm1150 = vcmp.eq.f32.partialorder %v1149, 8.507059e+37
    %v1151 = vand.u32 %v1139, 2147483648
    %v1152 = vor.u32 1.1754944e-38, %v1151
    %v1153 = vsel %vm1150, %v1152, %v1148
    %v1154 = vmul.f32 1.0, %v1153
    %v1155 = vtanh.pop %v1135
    %v1156 = vmul.f32 %v1154, %v964
    %1158 = vrot.lane.b32.xlu0 %v1155, 64
    %v1159 = vpop.permute.xlu0 %1158
    %v1161 = vmul.f32 %v1154, %v1159
    %1163 = vrot.lane.b32.xlu0 %v1161, 32
    %v1164 = vpop.permute.xlu0 %1163
    %v1166 = vadd.f32 %v1156, %v1164
    %v1167 = vtanh.pop %v1166
    %1169 = vrot.lane.b32.xlu0 %v1167, 64
    %v1170 = vpop.permute.xlu0 %1169
    %v1172 = vmul.f32 %v1154, %v1170
    %1174 = vrot.lane.b32.xlu0 %v1172, 32
    %v1175 = vpop.permute.xlu0 %1174
    %1177 = vrot.lane.b32.xlu0 %v1038, 64
    %v1178 = vpop.permute.xlu0 %1177
    %v1180 = vsel %vm512, %v1175, %v1178
    %v1182 = vsel %vm579, %v1180, 0
    %1184 = vmatpush.msra.mxu0 0.0
    %1185 = vmatpush.msra.mxu0 0.0
    %1186 = vmatpush.msra.mxu0 0.0
    %1187 = vmatpush.msra.mxu0 0.0
    %1188 = vmatpush.msra.mxu0 0.0
    %1189 = vmatpush.msra.mxu0 0.0
    %1190 = vmatpush.msra.mxu0 0.0
    %1191 = vmatpush.msra.mxu0 0.0
    %1192 = vmatpush.msra.mxu0 %v494
    %1193 = vmatpush.msra.mxu0 %v493
    %1194 = vmatpush.msra.mxu0 %v492
    %1195 = vmatpush.msra.mxu0 %v491
    %1196 = vmatpush.msra.mxu0 %v490
    %1197 = vmatpush.msra.mxu0 %v489
    %1198 = vmatpush.msra.mxu0 %v488
    %1199 = vmatpush.msra.mxu0 %v487
    %1200 = vmatmul.f32.gmra.mxu0 %v1182
    %v1201 = vpop.f32.mrf.mxu0
    %v1202 = vadd.f32 %v504, %v1201
    %1203 = vdwg.mxu0
    %v1204 = vxor.u32 %v1202, 2147483648
    %v1205 = vmul.f32 %v1204, 1.442695
    %v1206 = vpow.pop %v1205
    %v1207 = vadd.f32 %v1206, 1.0
    %v1208 = vrcp.pop %v1207
    %v1209 = vmul.f32 %v1207, %v1208
    %v1210 = vsub.f32 1.0, %v1209
    %v1211 = vmul.f32 %v1208, %v1210
    %v1212 = vadd.f32 %v1208, %v1211
    %vm1213 = vweird.f32 %v1207
    %vm1214 = vweird.f32 %v1208
    %vm1215 = vmor %vm1213, %vm1214
    %v1216 = vsel %vm1215, %v1208, %v1212
    %v1217 = vand.u32 2147483647, %v1207
    %vm1218 = vcmp.eq.f32.partialorder %v1217, 8.507059e+37
    %v1219 = vand.u32 %v1207, 2147483648
    %v1220 = vor.u32 1.1754944e-38, %v1219
    %v1221 = vsel %vm1218, %v1220, %v1216
    %v1222 = vmul.f32 1.0, %v1221
    %v1223 = vtanh.pop %v1202
    %v1224 = vmul.f32 %v1222, %v1032
    %1226 = vrot.lane.b32.xlu0 %v1223, 64
    %v1227 = vpop.permute.xlu0 %1226
    %v1229 = vmul.f32 %v1222, %v1227
    %1231 = vrot.lane.b32.xlu0 %v1229, 32
    %v1232 = vpop.permute.xlu0 %1231
    %v1234 = vadd.f32 %v1224, %v1232
    %v1235 = vtanh.pop %v1234
    %1237 = vrot.lane.b32.xlu0 %v1235, 64
    %v1238 = vpop.permute.xlu0 %1237
    %v1240 = vmul.f32 %v1222, %v1238
    %1242 = vrot.lane.b32.xlu0 %v1240, 32
    %v1243 = vpop.permute.xlu0 %1242
    %1246 = vrot.lane.b32.xlu0 %v1107, 64
    %v1247 = vpop.permute.xlu0 %1246
    %v1249 = vsel %vm512, %v1243, %v1247
    %v1251 = vsel %vm579, %v1249, 0
    %1253 = vmatpush.msra.mxu0 0.0
    %1254 = vmatpush.msra.mxu0 0.0
    %1255 = vmatpush.msra.mxu0 0.0
    %1256 = vmatpush.msra.mxu0 0.0
    %1257 = vmatpush.msra.mxu0 0.0
    %1258 = vmatpush.msra.mxu0 0.0
    %1259 = vmatpush.msra.mxu0 0.0
    %1260 = vmatpush.msra.mxu0 0.0
    %1261 = vmatpush.msra.mxu0 %v502
    %1262 = vmatpush.msra.mxu0 %v501
    %1263 = vmatpush.msra.mxu0 %v500
    %1264 = vmatpush.msra.mxu0 %v499
    %1265 = vmatpush.msra.mxu0 %v498
    %1266 = vmatpush.msra.mxu0 %v497
    %1267 = vmatpush.msra.mxu0 %v496
    %1268 = vmatpush.msra.mxu0 %v495
    %1269 = vmatmul.f32.gmra.mxu0 %v1251
    %v1270 = vpop.f32.mrf.mxu0
    %v1271 = vadd.f32 %v506, %v1270
    %1272 = vdwg.mxu0
    %v1273 = vxor.u32 %v1271, 2147483648
    %v1274 = vmul.f32 %v1273, 1.442695
    %v1275 = vpow.pop %v1274
    %v1276 = vadd.f32 %v1275, 1.0
    %v1277 = vrcp.pop %v1276
    %v1278 = vmul.f32 %v1276, %v1277
    %v1279 = vsub.f32 1.0, %v1278
    %v1280 = vmul.f32 %v1277, %v1279
    %v1281 = vadd.f32 %v1277, %v1280
    %vm1282 = vweird.f32 %v1276
    %vm1283 = vweird.f32 %v1277
    %vm1284 = vmor %vm1282, %vm1283
    %v1285 = vsel %vm1284, %v1277, %v1281
    %v1286 = vand.u32 2147483647, %v1276
    %vm1287 = vcmp.eq.f32.partialorder %v1286, 8.507059e+37
    %v1288 = vand.u32 %v1276, 2147483648
    %v1289 = vor.u32 1.1754944e-38, %v1288
    %v1290 = vsel %vm1287, %v1289, %v1285
    %v1291 = vmul.f32 1.0, %v1290
    %v1292 = vtanh.pop %v1271
    %v1293 = vmul.f32 %v1291, %v1101
    %1295 = vrot.lane.b32.xlu0 %v1292, 64
    %v1296 = vpop.permute.xlu0 %1295
    %v1298 = vmul.f32 %v1291, %v1296
    %1300 = vrot.lane.b32.xlu0 %v1298, 32
    %v1301 = vpop.permute.xlu0 %1300
    %v1303 = vadd.f32 %v1293, %v1301
    %v1304 = vtanh.pop %v1303
    %1306 = vrot.lane.b32.xlu0 %v1304, 64
    %v1307 = vpop.permute.xlu0 %1306
    %v1309 = vmul.f32 %v1291, %v1307
    %v1310 = vrot.slane %v478, 4
    %v1312 = vrot.slane %v481, 3
    %v1314 = vsel %vm510, %v1310, %v1312
    %v1315 = vsel %vm512, %v1175, 0
    %1317 = vmatpush.msra.mxu0 0.0
    %1318 = vmatpush.msra.mxu0 0.0
    %1319 = vmatpush.msra.mxu0 0.0
    %1320 = vmatpush.msra.mxu0 0.0
    %1321 = vmatpush.msra.mxu0 0.0
    %1322 = vmatpush.msra.mxu0 0.0
    %1323 = vmatpush.msra.mxu0 0.0
    %1324 = vmatpush.msra.mxu0 0.0
    %1325 = vmatpush.msra.mxu0 0.0
    %1326 = vmatpush.msra.mxu0 0.0
    %1327 = vmatpush.msra.mxu0 0.0
    %1328 = vmatpush.msra.mxu0 0.0
    %1329 = vmatpush.msra.mxu0 %v486
    %1330 = vmatpush.msra.mxu0 %v485
    %1331 = vmatpush.msra.mxu0 %v484
    %1332 = vmatpush.msra.mxu0 %v483
    %1333 = vmatmul.f32.gmra.mxu0 %v1315
    %v1334 = vpop.f32.mrf.mxu0
    %v1335 = vadd.f32 0.0, %v1334
    %1336 = vdwg.mxu0
    %v1337 = vadd.f32 %v1314, %v1335
    %v1338 = vxor.u32 %v1337, 2147483648
    %v1339 = vmul.f32 %v1338, 1.442695
    %v1340 = vpow.pop %v1339
    %v1341 = vadd.f32 %v1340, 1.0
    %v1342 = vrcp.pop %v1341
    %v1343 = vmul.f32 %v1341, %v1342
    %v1344 = vsub.f32 1.0, %v1343
    %v1345 = vmul.f32 %v1342, %v1344
    %v1346 = vadd.f32 %v1342, %v1345
    %vm1347 = vweird.f32 %v1341
    %vm1348 = vweird.f32 %v1342
    %vm1349 = vmor %vm1347, %vm1348
    %v1350 = vsel %vm1349, %v1342, %v1346
    %v1351 = vand.u32 2147483647, %v1341
    %vm1352 = vcmp.eq.f32.partialorder %v1351, 8.507059e+37
    %v1353 = vand.u32 %v1341, 2147483648
    %v1354 = vor.u32 1.1754944e-38, %v1353
    %v1355 = vsel %vm1352, %v1354, %v1350
    %v1356 = vmul.f32 1.0, %v1355
    %v1357 = vtanh.pop %v1337
    %v1358 = vmul.f32 %v1356, %v1166
    %1360 = vrot.lane.b32.xlu0 %v1357, 64
    %v1361 = vpop.permute.xlu0 %1360
    %v1363 = vmul.f32 %v1356, %v1361
    %1365 = vrot.lane.b32.xlu0 %v1363, 32
    %v1366 = vpop.permute.xlu0 %1365
    %v1368 = vadd.f32 %v1358, %v1366
    %v1369 = vtanh.pop %v1368
    %1371 = vrot.lane.b32.xlu0 %v1369, 64
    %v1372 = vpop.permute.xlu0 %1371
    %v1374 = vmul.f32 %v1356, %v1372
    %1376 = vrot.lane.b32.xlu0 %v1374, 32
    %v1377 = vpop.permute.xlu0 %1376
    %1379 = vrot.lane.b32.xlu0 %v1240, 64
    %v1380 = vpop.permute.xlu0 %1379
    %v1382 = vsel %vm512, %v1377, %v1380
    %v1384 = vsel %vm579, %v1382, 0
    %1386 = vmatpush.msra.mxu0 0.0
    %1387 = vmatpush.msra.mxu0 0.0
    %1388 = vmatpush.msra.mxu0 0.0
    %1389 = vmatpush.msra.mxu0 0.0
    %1390 = vmatpush.msra.mxu0 0.0
    %1391 = vmatpush.msra.mxu0 0.0
    %1392 = vmatpush.msra.mxu0 0.0
    %1393 = vmatpush.msra.mxu0 0.0
    %1394 = vmatpush.msra.mxu0 %v494
    %1395 = vmatpush.msra.mxu0 %v493
    %1396 = vmatpush.msra.mxu0 %v492
    %1397 = vmatpush.msra.mxu0 %v491
    %1398 = vmatpush.msra.mxu0 %v490
    %1399 = vmatpush.msra.mxu0 %v489
    %1400 = vmatpush.msra.mxu0 %v488
    %1401 = vmatpush.msra.mxu0 %v487
    %1402 = vmatmul.f32.gmra.mxu0 %v1384
    %v1403 = vpop.f32.mrf.mxu0
    %v1404 = vadd.f32 %v504, %v1403
    %1405 = vdwg.mxu0
    %v1406 = vxor.u32 %v1404, 2147483648
    %v1407 = vmul.f32 %v1406, 1.442695
    %v1408 = vpow.pop %v1407
    %v1409 = vadd.f32 %v1408, 1.0
    %v1410 = vrcp.pop %v1409
    %v1411 = vmul.f32 %v1409, %v1410
    %v1412 = vsub.f32 1.0, %v1411
    %v1413 = vmul.f32 %v1410, %v1412
    %v1414 = vadd.f32 %v1410, %v1413
    %vm1415 = vweird.f32 %v1409
    %vm1416 = vweird.f32 %v1410
    %vm1417 = vmor %vm1415, %vm1416
    %v1418 = vsel %vm1417, %v1410, %v1414
    %v1419 = vand.u32 2147483647, %v1409
    %vm1420 = vcmp.eq.f32.partialorder %v1419, 8.507059e+37
    %v1421 = vand.u32 %v1409, 2147483648
    %v1422 = vor.u32 1.1754944e-38, %v1421
    %v1423 = vsel %vm1420, %v1422, %v1418
    %v1424 = vmul.f32 1.0, %v1423
    %v1425 = vtanh.pop %v1404
    %v1426 = vmul.f32 %v1424, %v1234
    %1428 = vrot.lane.b32.xlu0 %v1425, 64
    %v1429 = vpop.permute.xlu0 %1428
    %v1431 = vmul.f32 %v1424, %v1429
    %1433 = vrot.lane.b32.xlu0 %v1431, 32
    %v1434 = vpop.permute.xlu0 %1433
    %v1436 = vadd.f32 %v1426, %v1434
    %v1437 = vtanh.pop %v1436
    %1439 = vrot.lane.b32.xlu0 %v1437, 64
    %v1440 = vpop.permute.xlu0 %1439
    %v1442 = vmul.f32 %v1424, %v1440
    %1444 = vrot.lane.b32.xlu0 %v1442, 32
    %v1445 = vpop.permute.xlu0 %1444
    %1448 = vrot.lane.b32.xlu0 %v1309, 64
    %v1449 = vpop.permute.xlu0 %1448
    %v1451 = vsel %vm512, %v1445, %v1449
    %v1453 = vsel %vm579, %v1451, 0
    %1455 = vmatpush.msra.mxu0 0.0
    %1456 = vmatpush.msra.mxu0 0.0
    %1457 = vmatpush.msra.mxu0 0.0
    %1458 = vmatpush.msra.mxu0 0.0
    %1459 = vmatpush.msra.mxu0 0.0
    %1460 = vmatpush.msra.mxu0 0.0
    %1461 = vmatpush.msra.mxu0 0.0
    %1462 = vmatpush.msra.mxu0 0.0
    %1463 = vmatpush.msra.mxu0 %v502
    %1464 = vmatpush.msra.mxu0 %v501
    %1465 = vmatpush.msra.mxu0 %v500
    %1466 = vmatpush.msra.mxu0 %v499
    %1467 = vmatpush.msra.mxu0 %v498
    %1468 = vmatpush.msra.mxu0 %v497
    %1469 = vmatpush.msra.mxu0 %v496
    %1470 = vmatpush.msra.mxu0 %v495
    %1471 = vmatmul.f32.gmra.mxu0 %v1453
    %v1472 = vpop.f32.mrf.mxu0
    %v1473 = vadd.f32 %v506, %v1472
    %1474 = vdwg.mxu0
    %v1475 = vxor.u32 %v1473, 2147483648
    %v1476 = vmul.f32 %v1475, 1.442695
    %v1477 = vpow.pop %v1476
    %v1478 = vadd.f32 %v1477, 1.0
    %v1479 = vrcp.pop %v1478
    %v1480 = vmul.f32 %v1478, %v1479
    %v1481 = vsub.f32 1.0, %v1480
    %v1482 = vmul.f32 %v1479, %v1481
    %v1483 = vadd.f32 %v1479, %v1482
    %vm1484 = vweird.f32 %v1478
    %vm1485 = vweird.f32 %v1479
    %vm1486 = vmor %vm1484, %vm1485
    %v1487 = vsel %vm1486, %v1479, %v1483
    %v1488 = vand.u32 2147483647, %v1478
    %vm1489 = vcmp.eq.f32.partialorder %v1488, 8.507059e+37
    %v1490 = vand.u32 %v1478, 2147483648
    %v1491 = vor.u32 1.1754944e-38, %v1490
    %v1492 = vsel %vm1489, %v1491, %v1487
    %v1493 = vmul.f32 1.0, %v1492
    %v1494 = vtanh.pop %v1473
    %v1495 = vmul.f32 %v1493, %v1303
    %1497 = vrot.lane.b32.xlu0 %v1494, 64
    %v1498 = vpop.permute.xlu0 %1497
    %v1500 = vmul.f32 %v1493, %v1498
    %1502 = vrot.lane.b32.xlu0 %v1500, 32
    %v1503 = vpop.permute.xlu0 %1502
    %v1505 = vadd.f32 %v1495, %v1503
    %v1506 = vtanh.pop %v1505
    %1508 = vrot.lane.b32.xlu0 %v1506, 64
    %v1509 = vpop.permute.xlu0 %1508
    %v1511 = vmul.f32 %v1493, %v1509
    %v1512 = vrot.slane %v478, 5
    %v1514 = vrot.slane %v481, 4
    %v1516 = vsel %vm510, %v1512, %v1514
    %v1517 = vsel %vm512, %v1377, 0
    %1519 = vmatpush.msra.mxu0 0.0
    %1520 = vmatpush.msra.mxu0 0.0
    %1521 = vmatpush.msra.mxu0 0.0
    %1522 = vmatpush.msra.mxu0 0.0
    %1523 = vmatpush.msra.mxu0 0.0
    %1524 = vmatpush.msra.mxu0 0.0
    %1525 = vmatpush.msra.mxu0 0.0
    %1526 = vmatpush.msra.mxu0 0.0
    %1527 = vmatpush.msra.mxu0 0.0
    %1528 = vmatpush.msra.mxu0 0.0
    %1529 = vmatpush.msra.mxu0 0.0
    %1530 = vmatpush.msra.mxu0 0.0
    %1531 = vmatpush.msra.mxu0 %v486
    %1532 = vmatpush.msra.mxu0 %v485
    %1533 = vmatpush.msra.mxu0 %v484
    %1534 = vmatpush.msra.mxu0 %v483
    %1535 = vmatmul.f32.gmra.mxu0 %v1517
    %v1536 = vpop.f32.mrf.mxu0
    %v1537 = vadd.f32 0.0, %v1536
    %1538 = vdwg.mxu0
    %v1539 = vadd.f32 %v1516, %v1537
    %v1540 = vxor.u32 %v1539, 2147483648
    %v1541 = vmul.f32 %v1540, 1.442695
    %v1542 = vpow.pop %v1541
    %v1543 = vadd.f32 %v1542, 1.0
    %v1544 = vrcp.pop %v1543
    %v1545 = vmul.f32 %v1543, %v1544
    %v1546 = vsub.f32 1.0, %v1545
    %v1547 = vmul.f32 %v1544, %v1546
    %v1548 = vadd.f32 %v1544, %v1547
    %vm1549 = vweird.f32 %v1543
    %vm1550 = vweird.f32 %v1544
    %vm1551 = vmor %vm1549, %vm1550
    %v1552 = vsel %vm1551, %v1544, %v1548
    %v1553 = vand.u32 2147483647, %v1543
    %vm1554 = vcmp.eq.f32.partialorder %v1553, 8.507059e+37
    %v1555 = vand.u32 %v1543, 2147483648
    %v1556 = vor.u32 1.1754944e-38, %v1555
    %v1557 = vsel %vm1554, %v1556, %v1552
    %v1558 = vmul.f32 1.0, %v1557
    %v1559 = vtanh.pop %v1539
    %v1560 = vmul.f32 %v1558, %v1368
    %1562 = vrot.lane.b32.xlu0 %v1559, 64
    %v1563 = vpop.permute.xlu0 %1562
    %v1565 = vmul.f32 %v1558, %v1563
    %1567 = vrot.lane.b32.xlu0 %v1565, 32
    %v1568 = vpop.permute.xlu0 %1567
    %v1570 = vadd.f32 %v1560, %v1568
    %v1571 = vtanh.pop %v1570
    %1573 = vrot.lane.b32.xlu0 %v1571, 64
    %v1574 = vpop.permute.xlu0 %1573
    %v1576 = vmul.f32 %v1558, %v1574
    %1578 = vrot.lane.b32.xlu0 %v1576, 32
    %v1579 = vpop.permute.xlu0 %1578
    %1581 = vrot.lane.b32.xlu0 %v1442, 64
    %v1582 = vpop.permute.xlu0 %1581
    %v1584 = vsel %vm512, %v1579, %v1582
    %v1586 = vsel %vm579, %v1584, 0
    %1588 = vmatpush.msra.mxu0 0.0
    %1589 = vmatpush.msra.mxu0 0.0
    %1590 = vmatpush.msra.mxu0 0.0
    %1591 = vmatpush.msra.mxu0 0.0
    %1592 = vmatpush.msra.mxu0 0.0
    %1593 = vmatpush.msra.mxu0 0.0
    %1594 = vmatpush.msra.mxu0 0.0
    %1595 = vmatpush.msra.mxu0 0.0
    %1596 = vmatpush.msra.mxu0 %v494
    %1597 = vmatpush.msra.mxu0 %v493
    %1598 = vmatpush.msra.mxu0 %v492
    %1599 = vmatpush.msra.mxu0 %v491
    %1600 = vmatpush.msra.mxu0 %v490
    %1601 = vmatpush.msra.mxu0 %v489
    %1602 = vmatpush.msra.mxu0 %v488
    %1603 = vmatpush.msra.mxu0 %v487
    %1604 = vmatmul.f32.gmra.mxu0 %v1586
    %v1605 = vpop.f32.mrf.mxu0
    %v1606 = vadd.f32 %v504, %v1605
    %1607 = vdwg.mxu0
    %v1608 = vxor.u32 %v1606, 2147483648
    %v1609 = vmul.f32 %v1608, 1.442695
    %v1610 = vpow.pop %v1609
    %v1611 = vadd.f32 %v1610, 1.0
    %v1612 = vrcp.pop %v1611
    %v1613 = vmul.f32 %v1611, %v1612
    %v1614 = vsub.f32 1.0, %v1613
    %v1615 = vmul.f32 %v1612, %v1614
    %v1616 = vadd.f32 %v1612, %v1615
    %vm1617 = vweird.f32 %v1611
    %vm1618 = vweird.f32 %v1612
    %vm1619 = vmor %vm1617, %vm1618
    %v1620 = vsel %vm1619, %v1612, %v1616
    %v1621 = vand.u32 2147483647, %v1611
    %vm1622 = vcmp.eq.f32.partialorder %v1621, 8.507059e+37
    %v1623 = vand.u32 %v1611, 2147483648
    %v1624 = vor.u32 1.1754944e-38, %v1623
    %v1625 = vsel %vm1622, %v1624, %v1620
    %v1626 = vmul.f32 1.0, %v1625
    %v1627 = vtanh.pop %v1606
    %v1628 = vmul.f32 %v1626, %v1436
    %1630 = vrot.lane.b32.xlu0 %v1627, 64
    %v1631 = vpop.permute.xlu0 %1630
    %v1633 = vmul.f32 %v1626, %v1631
    %1635 = vrot.lane.b32.xlu0 %v1633, 32
    %v1636 = vpop.permute.xlu0 %1635
    %v1638 = vadd.f32 %v1628, %v1636
    %v1639 = vtanh.pop %v1638
    %1641 = vrot.lane.b32.xlu0 %v1639, 64
    %v1642 = vpop.permute.xlu0 %1641
    %v1644 = vmul.f32 %v1626, %v1642
    %1646 = vrot.lane.b32.xlu0 %v1644, 32
    %v1647 = vpop.permute.xlu0 %1646
    %1650 = vrot.lane.b32.xlu0 %v1511, 64
    %v1651 = vpop.permute.xlu0 %1650
    %v1653 = vsel %vm512, %v1647, %v1651
    %v1655 = vsel %vm579, %v1653, 0
    %1657 = vmatpush.msra.mxu0 0.0
    %1658 = vmatpush.msra.mxu0 0.0
    %1659 = vmatpush.msra.mxu0 0.0
    %1660 = vmatpush.msra.mxu0 0.0
    %1661 = vmatpush.msra.mxu0 0.0
    %1662 = vmatpush.msra.mxu0 0.0
    %1663 = vmatpush.msra.mxu0 0.0
    %1664 = vmatpush.msra.mxu0 0.0
    %1665 = vmatpush.msra.mxu0 %v502
    %1666 = vmatpush.msra.mxu0 %v501
    %1667 = vmatpush.msra.mxu0 %v500
    %1668 = vmatpush.msra.mxu0 %v499
    %1669 = vmatpush.msra.mxu0 %v498
    %1670 = vmatpush.msra.mxu0 %v497
    %1671 = vmatpush.msra.mxu0 %v496
    %1672 = vmatpush.msra.mxu0 %v495
    %1673 = vmatmul.f32.gmra.mxu0 %v1655
    %v1674 = vpop.f32.mrf.mxu0
    %v1675 = vadd.f32 %v506, %v1674
    %1676 = vdwg.mxu0
    %v1677 = vxor.u32 %v1675, 2147483648
    %v1678 = vmul.f32 %v1677, 1.442695
    %v1679 = vpow.pop %v1678
    %v1680 = vadd.f32 %v1679, 1.0
    %v1681 = vrcp.pop %v1680
    %v1682 = vmul.f32 %v1680, %v1681
    %v1683 = vsub.f32 1.0, %v1682
    %v1684 = vmul.f32 %v1681, %v1683
    %v1685 = vadd.f32 %v1681, %v1684
    %vm1686 = vweird.f32 %v1680
    %vm1687 = vweird.f32 %v1681
    %vm1688 = vmor %vm1686, %vm1687
    %v1689 = vsel %vm1688, %v1681, %v1685
    %v1690 = vand.u32 2147483647, %v1680
    %vm1691 = vcmp.eq.f32.partialorder %v1690, 8.507059e+37
    %v1692 = vand.u32 %v1680, 2147483648
    %v1693 = vor.u32 1.1754944e-38, %v1692
    %v1694 = vsel %vm1691, %v1693, %v1689
    %v1695 = vmul.f32 1.0, %v1694
    %v1696 = vtanh.pop %v1675
    %v1697 = vmul.f32 %v1695, %v1505
    %1699 = vrot.lane.b32.xlu0 %v1696, 64
    %v1700 = vpop.permute.xlu0 %1699
    %v1702 = vmul.f32 %v1695, %v1700
    %1704 = vrot.lane.b32.xlu0 %v1702, 32
    %v1705 = vpop.permute.xlu0 %1704
    %v1707 = vadd.f32 %v1697, %v1705
    %v1708 = vtanh.pop %v1707
    %1710 = vrot.lane.b32.xlu0 %v1708, 64
    %v1711 = vpop.permute.xlu0 %1710
    %v1713 = vmul.f32 %v1695, %v1711
    %v1714 = vrot.slane %v478, 6
    %v1716 = vrot.slane %v481, 5
    %v1718 = vsel %vm510, %v1714, %v1716
    %v1719 = vsel %vm512, %v1579, 0
    %1721 = vmatpush.msra.mxu0 0.0
    %1722 = vmatpush.msra.mxu0 0.0
    %1723 = vmatpush.msra.mxu0 0.0
    %1724 = vmatpush.msra.mxu0 0.0
    %1725 = vmatpush.msra.mxu0 0.0
    %1726 = vmatpush.msra.mxu0 0.0
    %1727 = vmatpush.msra.mxu0 0.0
    %1728 = vmatpush.msra.mxu0 0.0
    %1729 = vmatpush.msra.mxu0 0.0
    %1730 = vmatpush.msra.mxu0 0.0
    %1731 = vmatpush.msra.mxu0 0.0
    %1732 = vmatpush.msra.mxu0 0.0
    %1733 = vmatpush.msra.mxu0 %v486
    %1734 = vmatpush.msra.mxu0 %v485
    %1735 = vmatpush.msra.mxu0 %v484
    %1736 = vmatpush.msra.mxu0 %v483
    %1737 = vmatmul.f32.gmra.mxu0 %v1719
    %v1738 = vpop.f32.mrf.mxu0
    %v1739 = vadd.f32 0.0, %v1738
    %1740 = vdwg.mxu0
    %v1741 = vadd.f32 %v1718, %v1739
    %v1742 = vxor.u32 %v1741, 2147483648
    %v1743 = vmul.f32 %v1742, 1.442695
    %v1744 = vpow.pop %v1743
    %v1745 = vadd.f32 %v1744, 1.0
    %v1746 = vrcp.pop %v1745
    %v1747 = vmul.f32 %v1745, %v1746
    %v1748 = vsub.f32 1.0, %v1747
    %v1749 = vmul.f32 %v1746, %v1748
    %v1750 = vadd.f32 %v1746, %v1749
    %vm1751 = vweird.f32 %v1745
    %vm1752 = vweird.f32 %v1746
    %vm1753 = vmor %vm1751, %vm1752
    %v1754 = vsel %vm1753, %v1746, %v1750
    %v1755 = vand.u32 2147483647, %v1745
    %vm1756 = vcmp.eq.f32.partialorder %v1755, 8.507059e+37
    %v1757 = vand.u32 %v1745, 2147483648
    %v1758 = vor.u32 1.1754944e-38, %v1757
    %v1759 = vsel %vm1756, %v1758, %v1754
    %v1760 = vmul.f32 1.0, %v1759
    %v1761 = vtanh.pop %v1741
    %v1762 = vmul.f32 %v1760, %v1570
    %1764 = vrot.lane.b32.xlu0 %v1761, 64
    %v1765 = vpop.permute.xlu0 %1764
    %v1767 = vmul.f32 %v1760, %v1765
    %1769 = vrot.lane.b32.xlu0 %v1767, 32
    %v1770 = vpop.permute.xlu0 %1769
    %v1772 = vadd.f32 %v1762, %v1770
    %v1773 = vtanh.pop %v1772
    %1775 = vrot.lane.b32.xlu0 %v1773, 64
    %v1776 = vpop.permute.xlu0 %1775
    %v1778 = vmul.f32 %v1760, %v1776
    %1780 = vrot.lane.b32.xlu0 %v1778, 32
    %v1781 = vpop.permute.xlu0 %1780
    %1783 = vrot.lane.b32.xlu0 %v1644, 64
    %v1784 = vpop.permute.xlu0 %1783
    %v1786 = vsel %vm512, %v1781, %v1784
    %v1788 = vsel %vm579, %v1786, 0
    %1790 = vmatpush.msra.mxu0 0.0
    %1791 = vmatpush.msra.mxu0 0.0
    %1792 = vmatpush.msra.mxu0 0.0
    %1793 = vmatpush.msra.mxu0 0.0
    %1794 = vmatpush.msra.mxu0 0.0
    %1795 = vmatpush.msra.mxu0 0.0
    %1796 = vmatpush.msra.mxu0 0.0
    %1797 = vmatpush.msra.mxu0 0.0
    %1798 = vmatpush.msra.mxu0 %v494
    %1799 = vmatpush.msra.mxu0 %v493
    %1800 = vmatpush.msra.mxu0 %v492
    %1801 = vmatpush.msra.mxu0 %v491
    %1802 = vmatpush.msra.mxu0 %v490
    %1803 = vmatpush.msra.mxu0 %v489
    %1804 = vmatpush.msra.mxu0 %v488
    %1805 = vmatpush.msra.mxu0 %v487
    %1806 = vmatmul.f32.gmra.mxu0 %v1788
    %v1807 = vpop.f32.mrf.mxu0
    %v1808 = vadd.f32 %v504, %v1807
    %1809 = vdwg.mxu0
    %v1810 = vxor.u32 %v1808, 2147483648
    %v1811 = vmul.f32 %v1810, 1.442695
    %v1812 = vpow.pop %v1811
    %v1813 = vadd.f32 %v1812, 1.0
    %v1814 = vrcp.pop %v1813
    %v1815 = vmul.f32 %v1813, %v1814
    %v1816 = vsub.f32 1.0, %v1815
    %v1817 = vmul.f32 %v1814, %v1816
    %v1818 = vadd.f32 %v1814, %v1817
    %vm1819 = vweird.f32 %v1813
    %vm1820 = vweird.f32 %v1814
    %vm1821 = vmor %vm1819, %vm1820
    %v1822 = vsel %vm1821, %v1814, %v1818
    %v1823 = vand.u32 2147483647, %v1813
    %vm1824 = vcmp.eq.f32.partialorder %v1823, 8.507059e+37
    %v1825 = vand.u32 %v1813, 2147483648
    %v1826 = vor.u32 1.1754944e-38, %v1825
    %v1827 = vsel %vm1824, %v1826, %v1822
    %v1828 = vmul.f32 1.0, %v1827
    %v1829 = vtanh.pop %v1808
    %v1830 = vmul.f32 %v1828, %v1638
    %1832 = vrot.lane.b32.xlu0 %v1829, 64
    %v1833 = vpop.permute.xlu0 %1832
    %v1835 = vmul.f32 %v1828, %v1833
    %1837 = vrot.lane.b32.xlu0 %v1835, 32
    %v1838 = vpop.permute.xlu0 %1837
    %v1840 = vadd.f32 %v1830, %v1838
    %v1841 = vtanh.pop %v1840
    %1843 = vrot.lane.b32.xlu0 %v1841, 64
    %v1844 = vpop.permute.xlu0 %1843
    %v1846 = vmul.f32 %v1828, %v1844
    %1848 = vrot.lane.b32.xlu0 %v1846, 32
    %v1849 = vpop.permute.xlu0 %1848
    %1852 = vrot.lane.b32.xlu0 %v1713, 64
    %v1853 = vpop.permute.xlu0 %1852
    %v1855 = vsel %vm512, %v1849, %v1853
    %v1857 = vsel %vm579, %v1855, 0
    %1859 = vmatpush.msra.mxu0 0.0
    %1860 = vmatpush.msra.mxu0 0.0
    %1861 = vmatpush.msra.mxu0 0.0
    %1862 = vmatpush.msra.mxu0 0.0
    %1863 = vmatpush.msra.mxu0 0.0
    %1864 = vmatpush.msra.mxu0 0.0
    %1865 = vmatpush.msra.mxu0 0.0
    %1866 = vmatpush.msra.mxu0 0.0
    %1867 = vmatpush.msra.mxu0 %v502
    %1868 = vmatpush.msra.mxu0 %v501
    %1869 = vmatpush.msra.mxu0 %v500
    %1870 = vmatpush.msra.mxu0 %v499
    %1871 = vmatpush.msra.mxu0 %v498
    %1872 = vmatpush.msra.mxu0 %v497
    %1873 = vmatpush.msra.mxu0 %v496
    %1874 = vmatpush.msra.mxu0 %v495
    %1875 = vmatmul.f32.gmra.mxu0 %v1857
    %v1876 = vpop.f32.mrf.mxu0
    %v1877 = vadd.f32 %v506, %v1876
    %1878 = vdwg.mxu0
    %v1879 = vxor.u32 %v1877, 2147483648
    %v1880 = vmul.f32 %v1879, 1.442695
    %v1881 = vpow.pop %v1880
    %v1882 = vadd.f32 %v1881, 1.0
    %v1883 = vrcp.pop %v1882
    %v1884 = vmul.f32 %v1882, %v1883
    %v1885 = vsub.f32 1.0, %v1884
    %v1886 = vmul.f32 %v1883, %v1885
    %v1887 = vadd.f32 %v1883, %v1886
    %vm1888 = vweird.f32 %v1882
    %vm1889 = vweird.f32 %v1883
    %vm1890 = vmor %vm1888, %vm1889
    %v1891 = vsel %vm1890, %v1883, %v1887
    %v1892 = vand.u32 2147483647, %v1882
    %vm1893 = vcmp.eq.f32.partialorder %v1892, 8.507059e+37
    %v1894 = vand.u32 %v1882, 2147483648
    %v1895 = vor.u32 1.1754944e-38, %v1894
    %v1896 = vsel %vm1893, %v1895, %v1891
    %v1897 = vmul.f32 1.0, %v1896
    %v1898 = vtanh.pop %v1877
    %v1899 = vmul.f32 %v1897, %v1707
    %1901 = vrot.lane.b32.xlu0 %v1898, 64
    %v1902 = vpop.permute.xlu0 %1901
    %v1904 = vmul.f32 %v1897, %v1902
    %1906 = vrot.lane.b32.xlu0 %v1904, 32
    %v1907 = vpop.permute.xlu0 %1906
    %v1909 = vadd.f32 %v1899, %v1907
    %v1910 = vtanh.pop %v1909
    %1912 = vrot.lane.b32.xlu0 %v1910, 64
    %v1913 = vpop.permute.xlu0 %1912
    %v1915 = vmul.f32 %v1897, %v1913
    %v1916 = vrot.slane %v478, 7
    %v1918 = vrot.slane %v481, 6
    %v1920 = vsel %vm510, %v1916, %v1918
    %v1921 = vsel %vm512, %v1781, 0
    %1923 = vmatpush.msra.mxu0 0.0
    %1924 = vmatpush.msra.mxu0 0.0
    %1925 = vmatpush.msra.mxu0 0.0
    %1926 = vmatpush.msra.mxu0 0.0
    %1927 = vmatpush.msra.mxu0 0.0
    %1928 = vmatpush.msra.mxu0 0.0
    %1929 = vmatpush.msra.mxu0 0.0
    %1930 = vmatpush.msra.mxu0 0.0
    %1931 = vmatpush.msra.mxu0 0.0
    %1932 = vmatpush.msra.mxu0 0.0
    %1933 = vmatpush.msra.mxu0 0.0
    %1934 = vmatpush.msra.mxu0 0.0
    %1935 = vmatpush.msra.mxu0 %v486
    %1936 = vmatpush.msra.mxu0 %v485
    %1937 = vmatpush.msra.mxu0 %v484
    %1938 = vmatpush.msra.mxu0 %v483
    %1939 = vmatmul.f32.gmra.mxu0 %v1921
    %v1940 = vpop.f32.mrf.mxu0
    %v1941 = vadd.f32 0.0, %v1940
    %1942 = vdwg.mxu0
    %v1943 = vadd.f32 %v1920, %v1941
    %v1944 = vxor.u32 %v1943, 2147483648
    %v1945 = vmul.f32 %v1944, 1.442695
    %v1946 = vpow.pop %v1945
    %v1947 = vadd.f32 %v1946, 1.0
    %v1948 = vrcp.pop %v1947
    %v1949 = vmul.f32 %v1947, %v1948
    %v1950 = vsub.f32 1.0, %v1949
    %v1951 = vmul.f32 %v1948, %v1950
    %v1952 = vadd.f32 %v1948, %v1951
    %vm1953 = vweird.f32 %v1947
    %vm1954 = vweird.f32 %v1948
    %vm1955 = vmor %vm1953, %vm1954
    %v1956 = vsel %vm1955, %v1948, %v1952
    %v1957 = vand.u32 2147483647, %v1947
    %vm1958 = vcmp.eq.f32.partialorder %v1957, 8.507059e+37
    %v1959 = vand.u32 %v1947, 2147483648
    %v1960 = vor.u32 1.1754944e-38, %v1959
    %v1961 = vsel %vm1958, %v1960, %v1956
    %v1962 = vmul.f32 1.0, %v1961
    %v1963 = vtanh.pop %v1943
    %v1964 = vmul.f32 %v1962, %v1772
    %1966 = vrot.lane.b32.xlu0 %v1963, 64
    %v1967 = vpop.permute.xlu0 %1966
    %v1969 = vmul.f32 %v1962, %v1967
    %1971 = vrot.lane.b32.xlu0 %v1969, 32
    %v1972 = vpop.permute.xlu0 %1971
    %v1974 = vadd.f32 %v1964, %v1972
    %v1975 = vtanh.pop %v1974
    %1977 = vrot.lane.b32.xlu0 %v1975, 64
    %v1978 = vpop.permute.xlu0 %1977
    %v1980 = vmul.f32 %v1962, %v1978
    %1982 = vrot.lane.b32.xlu0 %v1980, 32
    %v1983 = vpop.permute.xlu0 %1982
    %1985 = vrot.lane.b32.xlu0 %v1846, 64
    %v1986 = vpop.permute.xlu0 %1985
    %v1988 = vsel %vm512, %v1983, %v1986
    %v1990 = vsel %vm579, %v1988, 0
    %1992 = vmatpush.msra.mxu0 0.0
    %1993 = vmatpush.msra.mxu0 0.0
    %1994 = vmatpush.msra.mxu0 0.0
    %1995 = vmatpush.msra.mxu0 0.0
    %1996 = vmatpush.msra.mxu0 0.0
    %1997 = vmatpush.msra.mxu0 0.0
    %1998 = vmatpush.msra.mxu0 0.0
    %1999 = vmatpush.msra.mxu0 0.0
    %2000 = vmatpush.msra.mxu0 %v494
    %2001 = vmatpush.msra.mxu0 %v493
    %2002 = vmatpush.msra.mxu0 %v492
    %2003 = vmatpush.msra.mxu0 %v491
    %2004 = vmatpush.msra.mxu0 %v490
    %2005 = vmatpush.msra.mxu0 %v489
    %2006 = vmatpush.msra.mxu0 %v488
    %2007 = vmatpush.msra.mxu0 %v487
    %2008 = vmatmul.f32.gmra.mxu0 %v1990
    %v2009 = vpop.f32.mrf.mxu0
    %v2010 = vadd.f32 %v504, %v2009
    %2011 = vdwg.mxu0
    %v2012 = vxor.u32 %v2010, 2147483648
    %v2013 = vmul.f32 %v2012, 1.442695
    %v2014 = vpow.pop %v2013
    %v2015 = vadd.f32 %v2014, 1.0
    %v2016 = vrcp.pop %v2015
    %v2017 = vmul.f32 %v2015, %v2016
    %v2018 = vsub.f32 1.0, %v2017
    %v2019 = vmul.f32 %v2016, %v2018
    %v2020 = vadd.f32 %v2016, %v2019
    %vm2021 = vweird.f32 %v2015
    %vm2022 = vweird.f32 %v2016
    %vm2023 = vmor %vm2021, %vm2022
    %v2024 = vsel %vm2023, %v2016, %v2020
    %v2025 = vand.u32 2147483647, %v2015
    %vm2026 = vcmp.eq.f32.partialorder %v2025, 8.507059e+37
    %v2027 = vand.u32 %v2015, 2147483648
    %v2028 = vor.u32 1.1754944e-38, %v2027
    %v2029 = vsel %vm2026, %v2028, %v2024
    %v2030 = vmul.f32 1.0, %v2029
    %v2031 = vtanh.pop %v2010
    %v2032 = vmul.f32 %v2030, %v1840
    %2034 = vrot.lane.b32.xlu0 %v2031, 64
    %v2035 = vpop.permute.xlu0 %2034
    %v2037 = vmul.f32 %v2030, %v2035
    %2039 = vrot.lane.b32.xlu0 %v2037, 32
    %v2040 = vpop.permute.xlu0 %2039
    %v2042 = vadd.f32 %v2032, %v2040
    %v2043 = vtanh.pop %v2042
    %2045 = vrot.lane.b32.xlu0 %v2043, 64
    %v2046 = vpop.permute.xlu0 %2045
    %v2048 = vmul.f32 %v2030, %v2046
    %2050 = vrot.lane.b32.xlu0 %v2048, 32
    %v2051 = vpop.permute.xlu0 %2050
    %2054 = vrot.lane.b32.xlu0 %v1915, 64
    %v2055 = vpop.permute.xlu0 %2054
    %v2057 = vsel %vm512, %v2051, %v2055
    %v2059 = vsel %vm579, %v2057, 0
    %2061 = vmatpush.msra.mxu0 0.0
    %2062 = vmatpush.msra.mxu0 0.0
    %2063 = vmatpush.msra.mxu0 0.0
    %2064 = vmatpush.msra.mxu0 0.0
    %2065 = vmatpush.msra.mxu0 0.0
    %2066 = vmatpush.msra.mxu0 0.0
    %2067 = vmatpush.msra.mxu0 0.0
    %2068 = vmatpush.msra.mxu0 0.0
    %2069 = vmatpush.msra.mxu0 %v502
    %2070 = vmatpush.msra.mxu0 %v501
    %2071 = vmatpush.msra.mxu0 %v500
    %2072 = vmatpush.msra.mxu0 %v499
    %2073 = vmatpush.msra.mxu0 %v498
    %2074 = vmatpush.msra.mxu0 %v497
    %2075 = vmatpush.msra.mxu0 %v496
    %2076 = vmatpush.msra.mxu0 %v495
    %2077 = vmatmul.f32.gmra.mxu0 %v2059
    %v2078 = vpop.f32.mrf.mxu0
    %v2079 = vadd.f32 %v506, %v2078
    %2080 = vdwg.mxu0
    %v2081 = vxor.u32 %v2079, 2147483648
    %v2082 = vmul.f32 %v2081, 1.442695
    %v2083 = vpow.pop %v2082
    %v2084 = vadd.f32 %v2083, 1.0
    %v2085 = vrcp.pop %v2084
    %v2086 = vmul.f32 %v2084, %v2085
    %v2087 = vsub.f32 1.0, %v2086
    %v2088 = vmul.f32 %v2085, %v2087
    %v2089 = vadd.f32 %v2085, %v2088
    %vm2090 = vweird.f32 %v2084
    %vm2091 = vweird.f32 %v2085
    %vm2092 = vmor %vm2090, %vm2091
    %v2093 = vsel %vm2092, %v2085, %v2089
    %v2094 = vand.u32 2147483647, %v2084
    %vm2095 = vcmp.eq.f32.partialorder %v2094, 8.507059e+37
    %v2096 = vand.u32 %v2084, 2147483648
    %v2097 = vor.u32 1.1754944e-38, %v2096
    %v2098 = vsel %vm2095, %v2097, %v2093
    %v2099 = vmul.f32 1.0, %v2098
    %v2100 = vtanh.pop %v2079
    %v2101 = vmul.f32 %v2099, %v1909
    %2103 = vrot.lane.b32.xlu0 %v2100, 64
    %v2104 = vpop.permute.xlu0 %2103
    %v2106 = vmul.f32 %v2099, %v2104
    %2108 = vrot.lane.b32.xlu0 %v2106, 32
    %v2109 = vpop.permute.xlu0 %2108
    %v2111 = vadd.f32 %v2101, %v2109
    %v2112 = vtanh.pop %v2111
    %2114 = vrot.lane.b32.xlu0 %v2112, 64
    %v2115 = vpop.permute.xlu0 %2114
    %v2117 = vmul.f32 %v2099, %v2115
    %v2118 = vrot.slane %v905, 7
    %v2120 = vrot.slane %v1107, 6
    %v2122 = vrot.slane %v1309, 5
    %v2124 = vrot.slane %v1511, 4
    %v2126 = vrot.slane %v1713, 3
    %v2128 = vrot.slane %v1915, 2
    %v2131 = vrot.slane %v2117, 1
    %v2133 = vsel %vm510, %v704, %v2118
    %vm2134 = vcmask 1041408
    %v2135 = vsel %vm2134, %v2133, %v2120
    %vm2136 = vcmask 1042432
    %v2137 = vsel %vm2136, %v2135, %v2122
    %vm2138 = vcmask 1043456
    %v2139 = vsel %vm2138, %v2137, %v2124
    %vm2140 = vcmask 1044480
    %v2141 = vsel %vm2140, %v2139, %v2126
    %vm2142 = vcmask 1045504
    %v2143 = vsel %vm2142, %v2141, %v2128
    %vm2144 = vcmask 1046528
    %v2145 = vsel %vm2144, %v2143, %v2131
    %v2146 = vrot.slane %v704, 1
    %v2148 = vrot.slane %v1107, 7
    %v2150 = vrot.slane %v1309, 6
    %v2152 = vrot.slane %v1511, 5
    %v2154 = vrot.slane %v1713, 4
    %v2156 = vrot.slane %v1915, 3
    %v2158 = vrot.slane %v2117, 2
    %v2160 = vsel %vm510, %v2146, %v905
    %v2161 = vsel %vm2134, %v2160, %v2148
    %v2162 = vsel %vm2136, %v2161, %v2150
    %v2163 = vsel %vm2138, %v2162, %v2152
    %v2164 = vsel %vm2140, %v2163, %v2154
    %v2165 = vsel %vm2142, %v2164, %v2156
    %v2166 = vsel %vm2144, %v2165, %v2158
    %v2167 = vld [vmem:[%s4] sm:$0xff]
    %v2168 = vld [vmem:[%s4 + $0x8] sm:$0xff]
    %v2169 = vld [vmem:[%s4 + $0x10] sm:$0xff]
    %v2170 = vld [vmem:[%s4 + $0x18] sm:$0xff]
    %v2171 = vld [vmem:[%s5] sm:$0x1]
    %v2173 = vperm.slane %v2171, 0
    %2177 = vrot.lane.b32.xlu0 %v2145, 32
    %v2178 = vpop.permute.xlu0 %2177
    %2179 = vrot.lane.b32.xlu0 %v2166, 32
    %v2180 = vpop.permute.xlu0 %2179
    %v2181 = vsel %vm512, %v2178, 0
    %v2183 = vsel %vm512, %v2180, 0
    %2185 = vmatpush.msra.mxu0 0.0
    %2186 = vmatpush.msra.mxu0 0.0
    %2187 = vmatpush.msra.mxu0 0.0
    %2188 = vmatpush.msra.mxu0 0.0
    %2189 = vmatpush.msra.mxu0 0.0
    %2190 = vmatpush.msra.mxu0 0.0
    %2191 = vmatpush.msra.mxu0 0.0
    %2192 = vmatpush.msra.mxu0 0.0
    %2193 = vmatpush.msra.mxu0 0.0
    %2194 = vmatpush.msra.mxu0 0.0
    %2195 = vmatpush.msra.mxu0 0.0
    %2196 = vmatpush.msra.mxu0 0.0
    %2197 = vmatpush.msra.mxu0 %v2170
    %2198 = vmatpush.msra.mxu0 %v2169
    %2199 = vmatpush.msra.mxu0 %v2168
    %2200 = vmatpush.msra.mxu0 %v2167
    %2201 = vmatmul.f32.gmra.mxu0 %v2181
    %v2202 = vpop.f32.mrf.mxu0
    %v2203 = vadd.f32 %v2173, %v2202
    %2204 = vmatmul.f32.gmra.mxu0 %v2183
    %v2205 = vpop.f32.mrf.mxu0
    %v2206 = vadd.f32 %v2173, %v2205
    %2207 = vdwg.mxu0
    %vm2208 = vcmask 64512
    %2209 = vst.msk [vmem:[#allocation8] sm:$0xff] %vm2208, %v2203
    %2210 = vst.msk [vmem:[#allocation8 + $0x8] sm:$0xff] %vm2208, %v2206
    // Predicated region
    $region38: #{tpu_custom_call.1} parent=1 // pred_check
      _
    $region39: #{tpu_custom_call.1} parent=1 // pred_check_branch
      %2212 = sbr.rel (0) target = $region41
    $region40: #{tpu_custom_call.1} parent=1 // pred_region
      %2214 = vsyncadd [#allocation4], 0
      %s2215 = sshll.u32 [#allocation8], 4
      %s2216 = int_to_ptr.vmem [resolvable:$true] %s2215
      %s2217 = sshll.u32 %s6, 4
      %s2218 = int_to_ptr.hbm [resolvable:$true] %s2217
      %2223 = dma.vmem_to_hbm [thread:$0]  %s2216, 256, %s2218, [#allocation4], 128, 128, 8
    $region41: #{tpu_custom_call.1} parent=1 // pred_fallthru
      _
    // Predicated region
    $region42: #{tpu_custom_call.1} parent=1 // pred_check
      _
    $region43: #{tpu_custom_call.1} parent=1 // pred_check_branch
      %2225 = sbr.rel (0) target = $region45
    $region44: #{tpu_custom_call.1} parent=1 // pred_region
      %2227 = dma.done [#allocation4], 256
    $region45: #{tpu_custom_call.1} parent=1 // pred_fallthru
      _
    %2228 = vsyncpa [#allocation3], 1
    %2229 = vsyncpa [#allocation6], 1
    %2230 = vsyncpa [#allocation4], 1

</llo_original>
